<compile_context>
chip_gen: v6e
topology: v6e:2x2x1
jax: 0.10.0
libtpu: 0.0.40
codegen_flags: <defaults>
</compile_context>

<pallas_src>
import functools

import jax
import jax.numpy as jnp
from jax.experimental import pallas as pl
from jax.experimental.pallas import tpu as pltpu


_MIB = 1024 * 1024


# ----------------------------------------------------------------------------- kernels


def _sdpa_attn_kernel(q_ref, k_ref, v_ref, o_ref, attn_ref, *, inv_temperature):
    """One (head_group, q_tile) step; full Lk per step (attn matrix is returned)."""
    # Native-dtype (bf16/f32) operands into the MXU; f32 accumulation.
    q = q_ref[...] * inv_temperature            # (G, TQ, D) single VPU multiply
    k = k_ref[...]                              # (G, Lk, D)
    v = v_ref[...]                              # (G, Lk, Dv)

    # QK^T contracting the last dims directly (no transposed copy of K).
    s = jnp.einsum("gqd,gkd->gqk", q, k, preferred_element_type=jnp.float32)

    m = jnp.max(s, axis=-1, keepdims=True)
    p = jnp.exp(s - m)
    denom = jnp.sum(p, axis=-1, keepdims=True)
    # Exact divide for the *returned* attention matrix (rows sum to 1, matches torch);
    # cast to the output dtype immediately so the f32 intermediate can be retired.
    attn = (p / denom).astype(attn_ref.dtype)

    out = jnp.einsum("gqk,gkd->gqd", attn.astype(v.dtype), v,
                     preferred_element_type=jnp.float32)

    attn_ref[...] = attn                        # input dtype, not f32
    o_ref[...] = out.astype(o_ref.dtype)


def _sdpa_flash_kernel(q_ref, k_ref, v_ref, o_ref, qs_sc, m_sc, l_sc, acc_sc,
                       *, inv_temperature):
    """Flash-style online softmax over the k-tile grid axis; attn never hits HBM."""
    ki = pl.program_id(2)

    @pl.when(ki == 0)
    def _():
        # q scale hoisted out of the k loop: scaled once per q tile into VMEM scratch.
        qs_sc[...] = q_ref[...] * inv_temperature
        m_sc[...] = jnp.full_like(m_sc, -jnp.inf)
        l_sc[...] = jnp.zeros_like(l_sc)
        acc_sc[...] = jnp.zeros_like(acc_sc)

    q = qs_sc[...]                              # (G, TQ, D), already scaled
    k = k_ref[...]                              # (G, TK, D)
    v = v_ref[...]                              # (G, TK, Dv)

    s = jnp.einsum("gqd,gkd->gqk", q, k, preferred_element_type=jnp.float32)

    m_prev = m_sc[...]
    m_new = jnp.maximum(m_prev, jnp.max(s, axis=-1, keepdims=True))
    alpha = jnp.exp(m_prev - m_new)
    p = jnp.exp(s - m_new)

    l_sc[...] = alpha * l_sc[...] + jnp.sum(p, axis=-1, keepdims=True)
    acc_sc[...] = alpha * acc_sc[...] + jnp.einsum(
        "gqk,gkd->gqd", p.astype(v.dtype), v, preferred_element_type=jnp.float32)
    m_sc[...] = m_new

    @pl.when(ki == pl.num_programs(2) - 1)
    def _():
        # Approximate reciprocal is fine here: only the normalized output is exposed.
        o_ref[...] = (acc_sc[...] *
                      pl.reciprocal(l_sc[...], approx=True)).astype(o_ref.dtype)


# -------------------------------------------------------------------- chip / budgets


def _chip_profile():
    """(vmem_capacity_bytes, multi_core) with conservative fallbacks."""
    kind = ""
    try:
        kind = str(getattr(jax.devices()[0], "device_kind", "")).lower()
    except Exception:
        pass
    multi_core = "v7" in kind                       # v7x: 2 TensorCores per chip
    vmem_bytes = 64 * _MIB if "v7" in kind else 128 * _MIB
    try:
        info = pltpu.get_tpu_info()
        cap = getattr(info, "vmem_capacity_bytes", None)
        if cap:
            vmem_bytes = int(cap)
    except Exception:
        pass
    return vmem_bytes, multi_core


def _budgets(vmem_bytes):
    """Per-generation vmem limit, per-step block budget, and tile targets."""
    vmem_limit = min((vmem_bytes * 3) // 4, 112 * _MIB)
    block_budget = min((vmem_bytes * 2) // 5, 60 * _MIB)
    big_vmem = vmem_bytes >= 96 * _MIB
    q_target = 1024 if big_vmem else 512    # intensity: >= ~700 flops/byte on v6e
    k_target = 4096 if big_vmem else 2048   # K/V fully resident for moderate Lk
    return vmem_limit, block_budget, q_target, k_target


# ----------------------------------------------------------------------- tile selection


def _pick_seq_tile(total, target, quantum):
    """Largest tile <= target that divides `total` and is a multiple of `quantum`
    (dtype-aware sublane packing), else the full extent (untiled)."""
    if total <= target:
        return total
    t = (target // quantum) * quantum
    while t >= quantum:
        if total % t == 0:
            return t
        t -= quantum
    return total


def _shrink(total, cur, quantum):
    if cur <= quantum:
        return None
    nxt = _pick_seq_tile(total, max(quantum, cur // 2), quantum)
    return nxt if nxt < cur else None


def _divisors_desc(n):
    return [d for d in range(n, 0, -1) if n % d == 0]


def _pick_head_group(bh, n_parallel_tiles, fits, multi_core):
    """Largest divisor of bh whose per-step blocks fit the VMEM budget.

    On multi-TensorCore chips (v7x) prefer a head group whose parallel-step product
    is even (ideally >= 4) so both TensorCores get equal work; on single-TC chips
    (v5e/v6e) just take the largest group that fits.
    """
    candidates = [g for g in _divisors_desc(bh) if fits(g)]
    if not candidates:
        return 1
    if not multi_core:
        return candidates[0]
    for min_steps in (4, 2):
        for g in candidates:
            steps = (bh // g) * n_parallel_tiles
            if steps >= min_steps and steps % 2 == 0:
                return g
    return candidates[0]


def _attn_step_bytes(g, tq, lk, d, dv, in_sz, out_sz, attn_sz):
    blocks = 2 * g * in_sz * (tq * d + lk * d + lk * dv)          # double-buffered inputs
    blocks += 2 * g * (tq * dv * out_sz + tq * lk * attn_sz)      # double-buffered outputs
    temps = 4 * g * (2 * tq * lk + tq * dv + tq * d)              # f32 s/p + out acc + q
    temps += g * tq * lk * attn_sz                                # cast attn
    return blocks + temps


def _flash_step_bytes(g, tq, tk, d, dv, in_sz, out_sz, kv_buffers):
    blocks = 2 * g * in_sz * tq * d                               # q (double buffered)
    blocks += kv_buffers * g * in_sz * (tk * d + tk * dv)         # k, v
    blocks += 2 * g * out_sz * tq * dv                            # output
    scratch = g * (in_sz * tq * d + 4 * (tq * dv + 2 * tq))       # scaled q, acc, m, l
    temps = 4 * g * (2 * tq * tk)                                 # s, p (f32)
    return blocks + scratch + temps


def _maybe_buffered_spec(block_shape, index_map, buffers):
    if buffers > 2:
        try:
            return pl.BlockSpec(block_shape, index_map,
                                pipeline_mode=pl.Buffered(buffers))
        except TypeError:                     # older API without pipeline_mode kwarg
            pass
    return pl.BlockSpec(block_shape, index_map)


# ------------------------------------------------------------------------------ wrapper


def scaled_dot_product_attention(q, k, v, temperature, *, return_attn=True,
                                 head_group=None, q_block=None, k_block=None):
    """q, k, v: (B, H, L, D). Returns (output, attn) like the torch module.

    return_attn=False uses a flash-style kernel and returns (output, None) —
    recommended when the caller does not need the attention matrix (saves the
    dominant BH*Lq*Lk HBM writeback and removes the VMEM limit on Lk).
    Note: the returned attn is in the *input* dtype (bf16 for bf16 inputs).
    """
    B, H, Lq, D = q.shape
    Lk = k.shape[2]
    Dv = v.shape[3]
    BH = B * H

    qf = q.reshape(BH, Lq, D)
    kf = k.reshape(BH, Lk, D)
    vf = v.reshape(BH, Lk, Dv)

    inv_temperature = 1.0 / float(temperature)
    in_sz = q.dtype.itemsize
    out_sz = q.dtype.itemsize
    attn_sz = q.dtype.itemsize
    quantum = max(8, 32 // in_sz)            # sublane packing: f32->8, bf16->16, 8bit->32

    vmem_bytes, multi_core = _chip_profile()
    vmem_limit, block_budget, q_target, k_target = _budgets(vmem_bytes)

    # q tile
    if q_block is not None:
        assert Lq % q_block == 0 and (q_block == Lq or q_block % 8 == 0)
        TQ = q_block
    else:
        TQ = _pick_seq_tile(Lq, q_target, quantum)

    if return_attn:
        def step_bytes(g, tq):
            return _attn_step_bytes(g, tq, Lk, D, Dv, in_sz, out_sz, attn_sz)

        if q_block is None:
            # Shrink the q tile until a single head group fits the VMEM budget.
            while step_bytes(1, TQ) > block_budget:
                nxt = _shrink(Lq, TQ, quantum)
                if nxt is None:
                    break
                TQ = nxt

        if step_bytes(1, TQ) > block_budget:
            raise ValueError(
                "ScaledDotProductAttention: the attention-matrix return path does not "
                f"fit in VMEM for Lq={Lq}, Lk={Lk}, D={D}, Dv={Dv} on this chip "
                f"(per-step budget {block_budget} bytes). Use return_attn=False "
                "(flash path, attention never materialized) or pass a smaller q_block.")

        n_q = Lq // TQ
        if head_group is not None:
            assert BH % head_group == 0
            G = head_group
        else:
            G = _pick_head_group(BH, n_q, lambda g: step_bytes(g, TQ) <= block_budget,
                                 multi_core)

        grid = (BH // G, n_q)
        out_f, attn_f = pl.pallas_call(
            functools.partial(_sdpa_attn_kernel, inv_temperature=inv_temperature),
            out_shape=(
                jax.ShapeDtypeStruct((BH, Lq, Dv), q.dtype),
                jax.ShapeDtypeStruct((BH, Lq, Lk), q.dtype),   # attn in input dtype
            ),
            grid_spec=pltpu.PrefetchScalarGridSpec(
                num_scalar_prefetch=0,
                grid=grid,
                in_specs=[
                    pl.BlockSpec((G, TQ, D), lambda g, qi: (g, qi, 0)),
                    # K/V block index is constant across the q-tile axis -> stays
                    # resident in VMEM (no re-DMA between consecutive q tiles).
                    pl.BlockSpec((G, Lk, D), lambda g, qi: (g, 0, 0)),
                    pl.BlockSpec((G, Lk, Dv), lambda g, qi: (g, 0, 0)),
                ],
                out_specs=[
                    pl.BlockSpec((G, TQ, Dv), lambda g, qi: (g, qi, 0)),
                    pl.BlockSpec((G, TQ, Lk), lambda g, qi: (g, qi, 0)),
                ],
            ),
            compiler_params=pltpu.CompilerParams(
                dimension_semantics=("parallel", "parallel"),
                vmem_limit_bytes=vmem_limit,
            ),
        )(qf, kf, vf)
        return out_f.reshape(B, H, Lq, Dv), attn_f.reshape(B, H, Lq, Lk)

    # ---- flash-style path: no attention-matrix writeback ----
    if k_block is not None:
        assert Lk % k_block == 0 and (k_block == Lk or k_block % 8 == 0)
        TK = k_block
    else:
        TK = _pick_seq_tile(Lk, k_target, quantum)

    def flash_bytes(g, tq, tk, bufs):
        return _flash_step_bytes(g, tq, tk, D, Dv, in_sz, out_sz, bufs)

    # Shrink (K tile first, then Q tile) until a single head group fits the budget.
    if q_block is None or k_block is None:
        while flash_bytes(1, TQ, TK, 2) > block_budget:
            nxt = _shrink(Lk, TK, quantum) if k_block is None else None
            if nxt is not None:
                TK = nxt
                continue
            nxt = _shrink(Lq, TQ, quantum) if q_block is None else None
            if nxt is not None:
                TQ = nxt
                continue
            break

    n_q = Lq // TQ
    n_k = Lk // TK

    # Deeper K/V buffering on single-TC chips when K/V is re-streamed every inner
    # step and there is VMEM headroom (hides exposed DMA on v5e's lower HBM BW).
    kv_buffers = 2
    if (not multi_core) and n_k >= 3 and flash_bytes(1, TQ, TK, 3) <= block_budget:
        kv_buffers = 3

    if head_group is not None:
        assert BH % head_group == 0
        G = head_group
    else:
        G = _pick_head_group(
            BH, n_q, lambda g: flash_bytes(g, TQ, TK, kv_buffers) <= block_budget,
            multi_core)

    grid = (BH // G, n_q, n_k)
    out_f = pl.pallas_call(
        functools.partial(_sdpa_flash_kernel, inv_temperature=inv_temperature),
        out_shape=jax.ShapeDtypeStruct((BH, Lq, Dv), q.dtype),
        grid_spec=pltpu.PrefetchScalarGridSpec(
            num_scalar_prefetch=0,
            grid=grid,
            in_specs=[
                pl.BlockSpec((G, TQ, D), lambda g, qi, ki: (g, qi, 0)),
                _maybe_buffered_spec((G, TK, D), lambda g, qi, ki: (g, ki, 0),
                                     kv_buffers),
                _maybe_buffered_spec((G, TK, Dv), lambda g, qi, ki: (g, ki, 0),
                                     kv_buffers),
            ],
            out_specs=pl.BlockSpec((G, TQ, Dv), lambda g, qi, ki: (g, qi, 0)),
            scratch_shapes=[
                pltpu.VMEM((G, TQ, D), q.dtype),       # scaled q (hoisted out of k loop)
                pltpu.VMEM((G, TQ, 1), jnp.float32),   # running max
                pltpu.VMEM((G, TQ, 1), jnp.float32),   # running denom
                pltpu.VMEM((G, TQ, Dv), jnp.float32),  # output accumulator
            ],
        ),
        compiler_params=pltpu.CompilerParams(
            dimension_semantics=("parallel", "parallel", "arbitrary"),
            vmem_limit_bytes=vmem_limit,
        ),
    )(qf, kf, vf)
    return out_f.reshape(B, H, Lq, Dv), None


# ---------------------------------------------------------------------------- reference


def _reference(q, k, v, temperature):
    qf = q.astype(jnp.float32)
    kf = k.astype(jnp.float32)
    vf = v.astype(jnp.float32)
    scores = jnp.einsum("bhqd,bhkd->bhqk", qf / temperature, kf)
    attn = jax.nn.softmax(scores, axis=-1)
    out = jnp.einsum("bhqk,bhkd->bhqd", attn, vf)
    return out, attn


if __name__ == "__main__":
    key = jax.random.PRNGKey(0)

    # Case 1: small shapes matching the module's (B, H, L, D) convention, f32,
    # full (output, attn) return like the torch module.
    B, H, L, D = 2, 4, 8, 32
    temperature = float(D) ** 0.5
    kq, kk, kv, kq2, kk2, kv2 = jax.random.split(key, 6)
    q = jax.random.normal(kq, (B, H, L, D), dtype=jnp.float32)
    k = jax.random.normal(kk, (B, H, L, D), dtype=jnp.float32)
    v = jax.random.normal(kv, (B, H, L, D), dtype=jnp.float32)

    out, attn = scaled_dot_product_attention(q, k, v, temperature)
    out = jax.block_until_ready(out)
    attn = jax.block_until_ready(attn)
    ref_out, ref_attn = _reference(q, k, v, temperature)
    assert out.shape == (B, H, L, D) and attn.shape == (B, H, L, L)
    assert jnp.allclose(out.astype(jnp.float32), ref_out, atol=2e-2, rtol=2e-2)
    assert jnp.allclose(attn.astype(jnp.float32), ref_attn, atol=2e-2, rtol=2e-2)

    # Case 2: bf16 inputs + q-tiling; attn returned in the input dtype (bf16).
    B2, H2, L2, D2 = 2, 4, 128, 32
    temperature2 = float(D2) ** 0.5
    q2 = jax.random.normal(kq2, (B2, H2, L2, D2), dtype=jnp.bfloat16)
    k2 = jax.random.normal(kk2, (B2, H2, L2, D2), dtype=jnp.bfloat16)
    v2 = jax.random.normal(kv2, (B2, H2, L2, D2), dtype=jnp.bfloat16)

    out2, attn2 = scaled_dot_product_attention(q2, k2, v2, temperature2, q_block=64)
    out2 = jax.block_until_ready(out2)
    attn2 = jax.block_until_ready(attn2)
    ref_out2, ref_attn2 = _reference(q2, k2, v2, temperature2)
    assert attn2.dtype == q2.dtype
    assert jnp.allclose(out2.astype(jnp.float32), ref_out2, atol=5e-2, rtol=5e-2)
    assert jnp.allclose(attn2.astype(jnp.float32), ref_attn2, atol=5e-2, rtol=5e-2)

    # Case 3: flash-style path (no attention-matrix writeback), q- and k-tiled.
    out3, attn3 = scaled_dot_product_attention(
        q2, k2, v2, temperature2, return_attn=False, q_block=64, k_block=32)
    out3 = jax.block_until_ready(out3)
    assert attn3 is None
    assert jnp.allclose(out3.astype(jnp.float32), ref_out2, atol=5e-2, rtol=5e-2)

    # Case 4: default (auto-tiled) flash path — K/V resident (single k block).
    out4, _ = scaled_dot_product_attention(q2, k2, v2, temperature2, return_attn=False)
    out4 = jax.block_until_ready(out4)
    assert jnp.allclose(out4.astype(jnp.float32), ref_out2, atol=5e-2, rtol=5e-2)

    print("KERNEL_OK")
</pallas_src>

<mosaic_0001>
module attributes {stable_mosaic.version = 11 : i64} {
  func.func @_sdpa_attn_kernel(%arg0: i32, %arg1: i32, %arg2: memref<8x8x32xf32, #tpu.memory_space<vmem>>, %arg3: memref<8x8x32xf32, #tpu.memory_space<vmem>>, %arg4: memref<8x8x32xf32, #tpu.memory_space<vmem>>, %arg5: memref<8x8x32xf32, #tpu.memory_space<vmem>>, %arg6: memref<8x8x8xf32, #tpu.memory_space<vmem>>) attributes {dimension_semantics = [#tpu.dimension_semantics<parallel>, #tpu.dimension_semantics<parallel>], iteration_bounds = array<i64: 1, 1>, scalar_prefetch = 0 : i64, scratch_operands = 0 : i64, tpu.core_type = #tpu.core_type<tc>, window_params = [{transform_indices = @transform_0, window_bounds = array<i64: 8, 8, 32>}, {transform_indices = @transform_1, window_bounds = array<i64: 8, 8, 32>}, {transform_indices = @transform_2, window_bounds = array<i64: 8, 8, 32>}, {transform_indices = @transform_3, window_bounds = array<i64: 8, 8, 32>}, {transform_indices = @transform_4, window_bounds = array<i64: 8, 8, 8>}]} {
    %c0 = arith.constant 0 : index
    %c0_0 = arith.constant 0 : index
    %c0_1 = arith.constant 0 : index
    %0 = vector.load %arg2[%c0, %c0_0, %c0_1] : memref<8x8x32xf32, #tpu.memory_space<vmem>>, vector<8x8x32xf32>
    %cst = arith.constant 0.176776692 : f32
    %1 = vector.broadcast %cst : f32 to vector<8x8x32xf32>
    %2 = arith.mulf %0, %1 : vector<8x8x32xf32>
    %c0_2 = arith.constant 0 : index
    %c0_3 = arith.constant 0 : index
    %c0_4 = arith.constant 0 : index
    %3 = vector.load %arg3[%c0_2, %c0_3, %c0_4] : memref<8x8x32xf32, #tpu.memory_space<vmem>>, vector<8x8x32xf32>
    %c0_5 = arith.constant 0 : index
    %c0_6 = arith.constant 0 : index
    %c0_7 = arith.constant 0 : index
    %4 = vector.load %arg4[%c0_5, %c0_6, %c0_7] : memref<8x8x32xf32, #tpu.memory_space<vmem>>, vector<8x8x32xf32>
    "tpu.trace_start"() <{level = 10 : i32, message = "gqd,gkd->gqk"}> : () -> ()
    %cst_8 = arith.constant dense<0.000000e+00> : vector<8x8x8xf32>
    %5 = tpu.matmul %2, %3, %cst_8 {dimension_numbers = #tpu.dot_dimension_numbers<[2], [2], [1], [1], [0, 0, 0, 1, 1, 1], [0], [0]>} : vector<8x8x32xf32>, vector<8x8x32xf32>, vector<8x8x8xf32> -> vector<8x8x8xf32>
    "tpu.trace_stop"() : () -> ()
    %cst_9 = arith.constant dense<0xFF800000> : vector<8x8xf32>
    %6 = vector.multi_reduction <maximumf>, %5, %cst_9 [2] : vector<8x8x8xf32> to vector<8x8xf32>
    %7 = vector.shape_cast %6 : vector<8x8xf32> to vector<8x8x1xf32>
    %8 = vector.broadcast %7 : vector<8x8x1xf32> to vector<8x8x8xf32>
    %9 = arith.subf %5, %8 : vector<8x8x8xf32>
    %10 = math.exp %9 : vector<8x8x8xf32>
    %cst_10 = arith.constant dense<0.000000e+00> : vector<8x8xf32>
    %11 = vector.multi_reduction <add>, %10, %cst_10 [2] : vector<8x8x8xf32> to vector<8x8xf32>
    %12 = vector.shape_cast %11 : vector<8x8xf32> to vector<8x8x1xf32>
    %13 = vector.broadcast %12 : vector<8x8x1xf32> to vector<8x8x8xf32>
    %14 = arith.divf %10, %13 : vector<8x8x8xf32>
    "tpu.trace_start"() <{level = 10 : i32, message = "gqk,gkd->gqd"}> : () -> ()
    %cst_11 = arith.constant dense<0.000000e+00> : vector<8x8x32xf32>
    %15 = tpu.matmul %14, %4, %cst_11 {dimension_numbers = #tpu.dot_dimension_numbers<[2], [1], [1], [2], [0, 0, 0, 1, 1, 2], [0], [0]>} : vector<8x8x8xf32>, vector<8x8x32xf32>, vector<8x8x32xf32> -> vector<8x8x32xf32>
    "tpu.trace_stop"() : () -> ()
    %c0_12 = arith.constant 0 : index
    %c0_13 = arith.constant 0 : index
    %c0_14 = arith.constant 0 : index
    %16 = vector.load %arg6[%c0_12, %c0_13, %c0_14] : memref<8x8x8xf32, #tpu.memory_space<vmem>>, vector<8x8x8xf32>
    tpu.vector_store %arg6[%c0_12, %c0_13, %c0_14], %14 {strides = array<i32>} : memref<8x8x8xf32, #tpu.memory_space<vmem>>, vector<8x8x8xf32>,
    %c0_15 = arith.constant 0 : index
    %c0_16 = arith.constant 0 : index
    %c0_17 = arith.constant 0 : index
    %17 = vector.load %arg5[%c0_15, %c0_16, %c0_17] : memref<8x8x32xf32, #tpu.memory_space<vmem>>, vector<8x8x32xf32>
    tpu.vector_store %arg5[%c0_15, %c0_16, %c0_17], %15 {strides = array<i32>} : memref<8x8x32xf32, #tpu.memory_space<vmem>>, vector<8x8x32xf32>,
    return
  }
  func.func @transform_0(%arg0: i32, %arg1: i32) -> (i32, i32, i32) {
    %c0_i32 = arith.constant 0 : i32
    %c0_i32_0 = arith.constant 0 : i32
    return %arg0, %arg1, %c0_i32 : i32, i32, i32
  }
  func.func @transform_1(%arg0: i32, %arg1: i32) -> (i32, i32, i32) {
    %c0_i32 = arith.constant 0 : i32
    %c0_i32_0 = arith.constant 0 : i32
    %c0_i32_1 = arith.constant 0 : i32
    return %arg0, %c0_i32, %c0_i32_0 : i32, i32, i32
  }
  func.func @transform_2(%arg0: i32, %arg1: i32) -> (i32, i32, i32) {
    %c0_i32 = arith.constant 0 : i32
    %c0_i32_0 = arith.constant 0 : i32
    %c0_i32_1 = arith.constant 0 : i32
    return %arg0, %c0_i32, %c0_i32_0 : i32, i32, i32
  }
  func.func @transform_3(%arg0: i32, %arg1: i32) -> (i32, i32, i32) {
    %c0_i32 = arith.constant 0 : i32
    %c0_i32_0 = arith.constant 0 : i32
    return %arg0, %arg1, %c0_i32 : i32, i32, i32
  }
  func.func @transform_4(%arg0: i32, %arg1: i32) -> (i32, i32, i32) {
    %c0_i32 = arith.constant 0 : i32
    %c0_i32_0 = arith.constant 0 : i32
    return %arg0, %arg1, %c0_i32 : i32, i32, i32
  }
}

</mosaic_0001>

<llo_original>
// kernel: tpu_custom_call.1
$region0: #{tpu_custom_call.1}
  #allocation0 [shape = 'u32[]', space=smem, size = 0x4, offset = 0x4, fixed_abs, tag = 'smem constant byte address 0x4 - core index']
  #allocation1 [shape = 'u32[144,128]{1,0:T(1,128)}', space=vmem, size = 0x12000, scoped, tag = 'internal scratch']
  %s0 = inlined_call_operand.hbm [shape: f32[8,8,32], index: 0, kind: input, shape index: {}]
  %s1 = inlined_call_operand.hbm [shape: f32[8,8,32], index: 1, kind: input, shape index: {}]
  %s2 = inlined_call_operand.hbm [shape: f32[8,8,32], index: 2, kind: input, shape index: {}]
  %s3 = inlined_call_operand.hbm [shape: f32[8,8,32], index: 3, kind: output, shape index: {0}]
  %s4 = inlined_call_operand.hbm [shape: f32[8,8,8], index: 4, kind: output, shape index: {1}]
  %5 = xla_tuple %s3, %s4
  %s6 = sld [smem:[#allocation0]]
  $region42: #{tpu_custom_call.1} parent=0
    _
  %s8 = ssub.s32 1, %s6
  %s9 = scalar_select 0, %s8, %s6
  $region1: #{tpu_custom_call.1} parent=0
    #allocation2 [shape = 'u8[32768]{0}', space=vmem, size = 0x8000, scoped, tag = 'input window, operand 0, single buffered']
    #allocation3 [shape = 's32[1]{0}', space=sflag, size = 0x4, scoped, tag = 'scoped memory for tpu_custom_call.1']
    #allocation4 [shape = 's32[1]{0}', space=sflag, size = 0x4, scoped, tag = 'scoped memory for tpu_custom_call.1']
    #allocation5 [shape = 'u8[32768]{0}', space=vmem, size = 0x8000, scoped, tag = 'input window, operand 1, single buffered']
    #allocation6 [shape = 's32[1]{0}', space=sflag, size = 0x4, scoped, tag = 'scoped memory for tpu_custom_call.1']
    #allocation7 [shape = 'u8[32768]{0}', space=vmem, size = 0x8000, scoped, tag = 'input window, operand 2, single buffered']
    #allocation8 [shape = 'u8[32768]{0}', space=vmem, size = 0x8000, scoped, tag = 'output window, operand 0, single buffered']
    #allocation9 [shape = 'u8[32768]{0}', space=vmem, size = 0x8000, scoped, tag = 'output window, operand 1, single buffered']
    #allocation10 [shape = 's32[1]{0}', space=sflag, size = 0x4, scoped, tag = 'scoped memory for tpu_custom_call.1']
    %10 = vsyncpa [#allocation3], 0
    %11 = vsyncpa [#allocation6], 0
    %12 = vsyncpa [#allocation4], 0
    %13 = vsyncpa [#allocation10], 0
    // Predicated region
    $region2: #{tpu_custom_call.1} parent=1 // pred_check
      _
    $region3: #{tpu_custom_call.1} parent=1 // pred_check_branch
      %15 = sbr.rel (0) target = $region5
    $region4: #{tpu_custom_call.1} parent=1 // pred_region
      %s17 = ssub.s32 1024, 1024
      %18 = vsyncadd [#allocation3], %s17
      %s19 = sshll.u32 [#allocation2], 4
      %s20 = int_to_ptr.vmem [resolvable:$true] %s19
      %25 = dma.hbm_to_vmem [thread:$0]  %s0, 1024, %s20, [#allocation3], 128, 128, 8
    $region5: #{tpu_custom_call.1} parent=1 // pred_fallthru
      _
    // Predicated region
    $region6: #{tpu_custom_call.1} parent=1 // pred_check
      _
    $region7: #{tpu_custom_call.1} parent=1 // pred_check_branch
      %27 = sbr.rel (0) target = $region9
    $region8: #{tpu_custom_call.1} parent=1 // pred_region
      %s29 = ssub.s32 1024, 1024
      %30 = vsyncadd [#allocation6], %s29
      %s31 = sshll.u32 [#allocation5], 4
      %s32 = int_to_ptr.vmem [resolvable:$true] %s31
      %37 = dma.hbm_to_vmem [thread:$0]  %s1, 1024, %s32, [#allocation6], 128, 128, 8
    $region9: #{tpu_custom_call.1} parent=1 // pred_fallthru
      _
    // Predicated region
    $region10: #{tpu_custom_call.1} parent=1 // pred_check
      _
    $region11: #{tpu_custom_call.1} parent=1 // pred_check_branch
      %39 = sbr.rel (0) target = $region13
    $region12: #{tpu_custom_call.1} parent=1 // pred_region
      %s41 = ssub.s32 1024, 1024
      %42 = vsyncadd [#allocation6], %s41
      %s43 = sshll.u32 [#allocation7], 4
      %s44 = int_to_ptr.vmem [resolvable:$true] %s43
      %49 = dma.hbm_to_vmem [thread:$0]  %s2, 1024, %s44, [#allocation6], 128, 128, 8
    $region13: #{tpu_custom_call.1} parent=1 // pred_fallthru
      _
    // Predicated region
    $region14: #{tpu_custom_call.1} parent=1 // pred_check
      _
    $region15: #{tpu_custom_call.1} parent=1 // pred_check_branch
      %51 = sbr.rel (0) target = $region17
    $region16: #{tpu_custom_call.1} parent=1 // pred_region
      %52 = dma.done [#allocation3], 1024
    $region17: #{tpu_custom_call.1} parent=1 // pred_fallthru
      _
    // Predicated region
    $region18: #{tpu_custom_call.1} parent=1 // pred_check
      _
    $region19: #{tpu_custom_call.1} parent=1 // pred_check_branch
      %54 = sbr.rel (0) target = $region21
    $region20: #{tpu_custom_call.1} parent=1 // pred_region
      %55 = dma.done [#allocation6], 1024
    $region21: #{tpu_custom_call.1} parent=1 // pred_fallthru
      _
    // Predicated region
    $region22: #{tpu_custom_call.1} parent=1 // pred_check
      _
    $region23: #{tpu_custom_call.1} parent=1 // pred_check_branch
      %57 = sbr.rel (0) target = $region25
    $region24: #{tpu_custom_call.1} parent=1 // pred_region
      %58 = dma.done [#allocation6], 1024
    $region25: #{tpu_custom_call.1} parent=1 // pred_fallthru
      _
    %v59 = vld [vmem:[#allocation2] sm:$0xff]
    %v60 = vld [vmem:[#allocation2 + $0x8] sm:$0xff]
    %v61 = vld [vmem:[#allocation2 + $0x10] sm:$0xff]
    %v62 = vld [vmem:[#allocation2 + $0x18] sm:$0xff]
    %v63 = vld [vmem:[#allocation2 + $0x20] sm:$0xff]
    %v64 = vld [vmem:[#allocation2 + $0x28] sm:$0xff]
    %v65 = vld [vmem:[#allocation2 + $0x30] sm:$0xff]
    %v66 = vld [vmem:[#allocation2 + $0x38] sm:$0xff]
    %v67 = vmul.f32 %v59, 0.17677669
    %v68 = vmul.f32 %v60, 0.17677669
    %v69 = vmul.f32 %v61, 0.17677669
    %v70 = vmul.f32 %v62, 0.17677669
    %v71 = vmul.f32 %v63, 0.17677669
    %v72 = vmul.f32 %v64, 0.17677669
    %v73 = vmul.f32 %v65, 0.17677669
    %v74 = vmul.f32 %v66, 0.17677669
    %v75 = vld [vmem:[#allocation5] sm:$0xff]
    %v76 = vld [vmem:[#allocation5 + $0x8] sm:$0xff]
    %v77 = vld [vmem:[#allocation5 + $0x10] sm:$0xff]
    %v78 = vld [vmem:[#allocation5 + $0x18] sm:$0xff]
    %v79 = vld [vmem:[#allocation5 + $0x20] sm:$0xff]
    %v80 = vld [vmem:[#allocation5 + $0x28] sm:$0xff]
    %v81 = vld [vmem:[#allocation5 + $0x30] sm:$0xff]
    %v82 = vld [vmem:[#allocation5 + $0x38] sm:$0xff]
    %v83 = vld [vmem:[#allocation7] sm:$0xff]
    %v84 = vld [vmem:[#allocation7 + $0x8] sm:$0xff]
    %v85 = vld [vmem:[#allocation7 + $0x10] sm:$0xff]
    %v86 = vld [vmem:[#allocation7 + $0x18] sm:$0xff]
    %v87 = vld [vmem:[#allocation7 + $0x20] sm:$0xff]
    %v88 = vld [vmem:[#allocation7 + $0x28] sm:$0xff]
    %v89 = vld [vmem:[#allocation7 + $0x30] sm:$0xff]
    %v90 = vld [vmem:[#allocation7 + $0x38] sm:$0xff]
    %vm91 = vcmask 261120
    %v93 = vsel %vm91, %v67, 0
    %v96 = vsel %vm91, %v75, 0
    %98 = vmatprep.subr.mxu0 0.0
    %99 = vmatpush1.xpose.msra.mxu0 0.0
    %100 = vmatprep.subr.mxu0 0.0
    %101 = vmatpush1.xpose.msra.mxu0 0.0
    %102 = vmatprep.subr.mxu0 0.0
    %103 = vmatpush1.xpose.msra.mxu0 0.0
    %104 = vmatprep.subr.mxu0 0.0
    %105 = vmatpush1.xpose.msra.mxu0 0.0
    %106 = vmatprep.subr.mxu0 0.0
    %107 = vmatpush1.xpose.msra.mxu0 0.0
    %108 = vmatprep.subr.mxu0 0.0
    %109 = vmatpush1.xpose.msra.mxu0 0.0
    %110 = vmatprep.subr.mxu0 0.0
    %111 = vmatpush1.xpose.msra.mxu0 0.0
    %112 = vmatprep.subr.mxu0 0.0
    %113 = vmatpush1.xpose.msra.mxu0 0.0
    %114 = vmatprep.subr.mxu0 0.0
    %115 = vmatpush1.xpose.msra.mxu0 0.0
    %116 = vmatprep.subr.mxu0 0.0
    %117 = vmatpush1.xpose.msra.mxu0 0.0
    %118 = vmatprep.subr.mxu0 0.0
    %119 = vmatpush1.xpose.msra.mxu0 0.0
    %120 = vmatprep.subr.mxu0 0.0
    %121 = vmatpush1.xpose.msra.mxu0 0.0
    %122 = vmatprep.subr.mxu0 0.0
    %123 = vmatpush1.xpose.msra.mxu0 0.0
    %124 = vmatprep.subr.mxu0 0.0
    %125 = vmatpush1.xpose.msra.mxu0 0.0
    %126 = vmatprep.subr.mxu0 0.0
    %127 = vmatpush1.xpose.msra.mxu0 0.0
    %128 = vmatprep.subr.mxu0 0.0
    %129 = vmatpush1.xpose.msra.mxu0 %v96
    %130 = vmatprep.subr.mxu0 0.0
    %131 = vmatpush2.xpose.msra.mxu0 0.0
    %132 = vmatprep.subr.mxu0 0.0
    %133 = vmatpush2.xpose.msra.mxu0 0.0
    %134 = vmatprep.subr.mxu0 0.0
    %135 = vmatpush2.xpose.msra.mxu0 0.0
    %136 = vmatprep.subr.mxu0 0.0
    %137 = vmatpush2.xpose.msra.mxu0 0.0
    %138 = vmatprep.subr.mxu0 0.0
    %139 = vmatpush2.xpose.msra.mxu0 0.0
    %140 = vmatprep.subr.mxu0 0.0
    %141 = vmatpush2.xpose.msra.mxu0 0.0
    %142 = vmatprep.subr.mxu0 0.0
    %143 = vmatpush2.xpose.msra.mxu0 0.0
    %144 = vmatprep.subr.mxu0 0.0
    %145 = vmatpush2.xpose.msra.mxu0 0.0
    %146 = vmatprep.subr.mxu0 0.0
    %147 = vmatpush2.xpose.msra.mxu0 0.0
    %148 = vmatprep.subr.mxu0 0.0
    %149 = vmatpush2.xpose.msra.mxu0 0.0
    %150 = vmatprep.subr.mxu0 0.0
    %151 = vmatpush2.xpose.msra.mxu0 0.0
    %152 = vmatprep.subr.mxu0 0.0
    %153 = vmatpush2.xpose.msra.mxu0 0.0
    %154 = vmatprep.subr.mxu0 0.0
    %155 = vmatpush2.xpose.msra.mxu0 0.0
    %156 = vmatprep.subr.mxu0 0.0
    %157 = vmatpush2.xpose.msra.mxu0 0.0
    %158 = vmatprep.subr.mxu0 0.0
    %159 = vmatpush2.xpose.msra.mxu0 0.0
    %160 = vmatprep.subr.mxu0 0.0
    %161 = vmatpush2.xpose.msra.mxu0 0.0
    %162 = vmatprep.mubr.f32.mxu0 0.0
    %163 = vmatmul.mubr.f32.gmra.mxu0 %v93
    %v164 = vpop.f32.mrf.mxu0
    %v165 = vadd.f32 0.0, %v164
    %v166 = vpop.f32.mrf.mxu0
    %167 = vdwg.mxu0
    %v169 = vsel %vm91, %v68, 0
    %v172 = vsel %vm91, %v76, 0
    %174 = vmatprep.subr.mxu0 0.0
    %175 = vmatpush1.xpose.msra.mxu0 0.0
    %176 = vmatprep.subr.mxu0 0.0
    %177 = vmatpush1.xpose.msra.mxu0 0.0
    %178 = vmatprep.subr.mxu0 0.0
    %179 = vmatpush1.xpose.msra.mxu0 0.0
    %180 = vmatprep.subr.mxu0 0.0
    %181 = vmatpush1.xpose.msra.mxu0 0.0
    %182 = vmatprep.subr.mxu0 0.0
    %183 = vmatpush1.xpose.msra.mxu0 0.0
    %184 = vmatprep.subr.mxu0 0.0
    %185 = vmatpush1.xpose.msra.mxu0 0.0
    %186 = vmatprep.subr.mxu0 0.0
    %187 = vmatpush1.xpose.msra.mxu0 0.0
    %188 = vmatprep.subr.mxu0 0.0
    %189 = vmatpush1.xpose.msra.mxu0 0.0
    %190 = vmatprep.subr.mxu0 0.0
    %191 = vmatpush1.xpose.msra.mxu0 0.0
    %192 = vmatprep.subr.mxu0 0.0
    %193 = vmatpush1.xpose.msra.mxu0 0.0
    %194 = vmatprep.subr.mxu0 0.0
    %195 = vmatpush1.xpose.msra.mxu0 0.0
    %196 = vmatprep.subr.mxu0 0.0
    %197 = vmatpush1.xpose.msra.mxu0 0.0
    %198 = vmatprep.subr.mxu0 0.0
    %199 = vmatpush1.xpose.msra.mxu0 0.0
    %200 = vmatprep.subr.mxu0 0.0
    %201 = vmatpush1.xpose.msra.mxu0 0.0
    %202 = vmatprep.subr.mxu0 0.0
    %203 = vmatpush1.xpose.msra.mxu0 0.0
    %204 = vmatprep.subr.mxu0 0.0
    %205 = vmatpush1.xpose.msra.mxu0 %v172
    %206 = vmatprep.subr.mxu0 0.0
    %207 = vmatpush2.xpose.msra.mxu0 0.0
    %208 = vmatprep.subr.mxu0 0.0
    %209 = vmatpush2.xpose.msra.mxu0 0.0
    %210 = vmatprep.subr.mxu0 0.0
    %211 = vmatpush2.xpose.msra.mxu0 0.0
    %212 = vmatprep.subr.mxu0 0.0
    %213 = vmatpush2.xpose.msra.mxu0 0.0
    %214 = vmatprep.subr.mxu0 0.0
    %215 = vmatpush2.xpose.msra.mxu0 0.0
    %216 = vmatprep.subr.mxu0 0.0
    %217 = vmatpush2.xpose.msra.mxu0 0.0
    %218 = vmatprep.subr.mxu0 0.0
    %219 = vmatpush2.xpose.msra.mxu0 0.0
    %220 = vmatprep.subr.mxu0 0.0
    %221 = vmatpush2.xpose.msra.mxu0 0.0
    %222 = vmatprep.subr.mxu0 0.0
    %223 = vmatpush2.xpose.msra.mxu0 0.0
    %224 = vmatprep.subr.mxu0 0.0
    %225 = vmatpush2.xpose.msra.mxu0 0.0
    %226 = vmatprep.subr.mxu0 0.0
    %227 = vmatpush2.xpose.msra.mxu0 0.0
    %228 = vmatprep.subr.mxu0 0.0
    %229 = vmatpush2.xpose.msra.mxu0 0.0
    %230 = vmatprep.subr.mxu0 0.0
    %231 = vmatpush2.xpose.msra.mxu0 0.0
    %232 = vmatprep.subr.mxu0 0.0
    %233 = vmatpush2.xpose.msra.mxu0 0.0
    %234 = vmatprep.subr.mxu0 0.0
    %235 = vmatpush2.xpose.msra.mxu0 0.0
    %236 = vmatprep.subr.mxu0 0.0
    %237 = vmatpush2.xpose.msra.mxu0 0.0
    %238 = vmatprep.mubr.f32.mxu0 0.0
    %239 = vmatmul.mubr.f32.gmra.mxu0 %v169
    %v240 = vpop.f32.mrf.mxu0
    %v241 = vadd.f32 0.0, %v240
    %v242 = vpop.f32.mrf.mxu0
    %243 = vdwg.mxu0
    %v245 = vsel %vm91, %v69, 0
    %v248 = vsel %vm91, %v77, 0
    %250 = vmatprep.subr.mxu0 0.0
    %251 = vmatpush1.xpose.msra.mxu0 0.0
    %252 = vmatprep.subr.mxu0 0.0
    %253 = vmatpush1.xpose.msra.mxu0 0.0
    %254 = vmatprep.subr.mxu0 0.0
    %255 = vmatpush1.xpose.msra.mxu0 0.0
    %256 = vmatprep.subr.mxu0 0.0
    %257 = vmatpush1.xpose.msra.mxu0 0.0
    %258 = vmatprep.subr.mxu0 0.0
    %259 = vmatpush1.xpose.msra.mxu0 0.0
    %260 = vmatprep.subr.mxu0 0.0
    %261 = vmatpush1.xpose.msra.mxu0 0.0
    %262 = vmatprep.subr.mxu0 0.0
    %263 = vmatpush1.xpose.msra.mxu0 0.0
    %264 = vmatprep.subr.mxu0 0.0
    %265 = vmatpush1.xpose.msra.mxu0 0.0
    %266 = vmatprep.subr.mxu0 0.0
    %267 = vmatpush1.xpose.msra.mxu0 0.0
    %268 = vmatprep.subr.mxu0 0.0
    %269 = vmatpush1.xpose.msra.mxu0 0.0
    %270 = vmatprep.subr.mxu0 0.0
    %271 = vmatpush1.xpose.msra.mxu0 0.0
    %272 = vmatprep.subr.mxu0 0.0
    %273 = vmatpush1.xpose.msra.mxu0 0.0
    %274 = vmatprep.subr.mxu0 0.0
    %275 = vmatpush1.xpose.msra.mxu0 0.0
    %276 = vmatprep.subr.mxu0 0.0
    %277 = vmatpush1.xpose.msra.mxu0 0.0
    %278 = vmatprep.subr.mxu0 0.0
    %279 = vmatpush1.xpose.msra.mxu0 0.0
    %280 = vmatprep.subr.mxu0 0.0
    %281 = vmatpush1.xpose.msra.mxu0 %v248
    %282 = vmatprep.subr.mxu0 0.0
    %283 = vmatpush2.xpose.msra.mxu0 0.0
    %284 = vmatprep.subr.mxu0 0.0
    %285 = vmatpush2.xpose.msra.mxu0 0.0
    %286 = vmatprep.subr.mxu0 0.0
    %287 = vmatpush2.xpose.msra.mxu0 0.0
    %288 = vmatprep.subr.mxu0 0.0
    %289 = vmatpush2.xpose.msra.mxu0 0.0
    %290 = vmatprep.subr.mxu0 0.0
    %291 = vmatpush2.xpose.msra.mxu0 0.0
    %292 = vmatprep.subr.mxu0 0.0
    %293 = vmatpush2.xpose.msra.mxu0 0.0
    %294 = vmatprep.subr.mxu0 0.0
    %295 = vmatpush2.xpose.msra.mxu0 0.0
    %296 = vmatprep.subr.mxu0 0.0
    %297 = vmatpush2.xpose.msra.mxu0 0.0
    %298 = vmatprep.subr.mxu0 0.0
    %299 = vmatpush2.xpose.msra.mxu0 0.0
    %300 = vmatprep.subr.mxu0 0.0
    %301 = vmatpush2.xpose.msra.mxu0 0.0
    %302 = vmatprep.subr.mxu0 0.0
    %303 = vmatpush2.xpose.msra.mxu0 0.0
    %304 = vmatprep.subr.mxu0 0.0
    %305 = vmatpush2.xpose.msra.mxu0 0.0
    %306 = vmatprep.subr.mxu0 0.0
    %307 = vmatpush2.xpose.msra.mxu0 0.0
    %308 = vmatprep.subr.mxu0 0.0
    %309 = vmatpush2.xpose.msra.mxu0 0.0
    %310 = vmatprep.subr.mxu0 0.0
    %311 = vmatpush2.xpose.msra.mxu0 0.0
    %312 = vmatprep.subr.mxu0 0.0
    %313 = vmatpush2.xpose.msra.mxu0 0.0
    %314 = vmatprep.mubr.f32.mxu0 0.0
    %315 = vmatmul.mubr.f32.gmra.mxu0 %v245
    %v316 = vpop.f32.mrf.mxu0
    %v317 = vadd.f32 0.0, %v316
    %v318 = vpop.f32.mrf.mxu0
    %319 = vdwg.mxu0
    %v321 = vsel %vm91, %v70, 0
    %v324 = vsel %vm91, %v78, 0
    %326 = vmatprep.subr.mxu0 0.0
    %327 = vmatpush1.xpose.msra.mxu0 0.0
    %328 = vmatprep.subr.mxu0 0.0
    %329 = vmatpush1.xpose.msra.mxu0 0.0
    %330 = vmatprep.subr.mxu0 0.0
    %331 = vmatpush1.xpose.msra.mxu0 0.0
    %332 = vmatprep.subr.mxu0 0.0
    %333 = vmatpush1.xpose.msra.mxu0 0.0
    %334 = vmatprep.subr.mxu0 0.0
    %335 = vmatpush1.xpose.msra.mxu0 0.0
    %336 = vmatprep.subr.mxu0 0.0
    %337 = vmatpush1.xpose.msra.mxu0 0.0
    %338 = vmatprep.subr.mxu0 0.0
    %339 = vmatpush1.xpose.msra.mxu0 0.0
    %340 = vmatprep.subr.mxu0 0.0
    %341 = vmatpush1.xpose.msra.mxu0 0.0
    %342 = vmatprep.subr.mxu0 0.0
    %343 = vmatpush1.xpose.msra.mxu0 0.0
    %344 = vmatprep.subr.mxu0 0.0
    %345 = vmatpush1.xpose.msra.mxu0 0.0
    %346 = vmatprep.subr.mxu0 0.0
    %347 = vmatpush1.xpose.msra.mxu0 0.0
    %348 = vmatprep.subr.mxu0 0.0
    %349 = vmatpush1.xpose.msra.mxu0 0.0
    %350 = vmatprep.subr.mxu0 0.0
    %351 = vmatpush1.xpose.msra.mxu0 0.0
    %352 = vmatprep.subr.mxu0 0.0
    %353 = vmatpush1.xpose.msra.mxu0 0.0
    %354 = vmatprep.subr.mxu0 0.0
    %355 = vmatpush1.xpose.msra.mxu0 0.0
    %356 = vmatprep.subr.mxu0 0.0
    %357 = vmatpush1.xpose.msra.mxu0 %v324
    %358 = vmatprep.subr.mxu0 0.0
    %359 = vmatpush2.xpose.msra.mxu0 0.0
    %360 = vmatprep.subr.mxu0 0.0
    %361 = vmatpush2.xpose.msra.mxu0 0.0
    %362 = vmatprep.subr.mxu0 0.0
    %363 = vmatpush2.xpose.msra.mxu0 0.0
    %364 = vmatprep.subr.mxu0 0.0
    %365 = vmatpush2.xpose.msra.mxu0 0.0
    %366 = vmatprep.subr.mxu0 0.0
    %367 = vmatpush2.xpose.msra.mxu0 0.0
    %368 = vmatprep.subr.mxu0 0.0
    %369 = vmatpush2.xpose.msra.mxu0 0.0
    %370 = vmatprep.subr.mxu0 0.0
    %371 = vmatpush2.xpose.msra.mxu0 0.0
    %372 = vmatprep.subr.mxu0 0.0
    %373 = vmatpush2.xpose.msra.mxu0 0.0
    %374 = vmatprep.subr.mxu0 0.0
    %375 = vmatpush2.xpose.msra.mxu0 0.0
    %376 = vmatprep.subr.mxu0 0.0
    %377 = vmatpush2.xpose.msra.mxu0 0.0
    %378 = vmatprep.subr.mxu0 0.0
    %379 = vmatpush2.xpose.msra.mxu0 0.0
    %380 = vmatprep.subr.mxu0 0.0
    %381 = vmatpush2.xpose.msra.mxu0 0.0
    %382 = vmatprep.subr.mxu0 0.0
    %383 = vmatpush2.xpose.msra.mxu0 0.0
    %384 = vmatprep.subr.mxu0 0.0
    %385 = vmatpush2.xpose.msra.mxu0 0.0
    %386 = vmatprep.subr.mxu0 0.0
    %387 = vmatpush2.xpose.msra.mxu0 0.0
    %388 = vmatprep.subr.mxu0 0.0
    %389 = vmatpush2.xpose.msra.mxu0 0.0
    %390 = vmatprep.mubr.f32.mxu0 0.0
    %391 = vmatmul.mubr.f32.gmra.mxu0 %v321
    %v392 = vpop.f32.mrf.mxu0
    %v393 = vadd.f32 0.0, %v392
    %v394 = vpop.f32.mrf.mxu0
    %395 = vdwg.mxu0
    %v397 = vsel %vm91, %v71, 0
    %v400 = vsel %vm91, %v79, 0
    %402 = vmatprep.subr.mxu0 0.0
    %403 = vmatpush1.xpose.msra.mxu0 0.0
    %404 = vmatprep.subr.mxu0 0.0
    %405 = vmatpush1.xpose.msra.mxu0 0.0
    %406 = vmatprep.subr.mxu0 0.0
    %407 = vmatpush1.xpose.msra.mxu0 0.0
    %408 = vmatprep.subr.mxu0 0.0
    %409 = vmatpush1.xpose.msra.mxu0 0.0
    %410 = vmatprep.subr.mxu0 0.0
    %411 = vmatpush1.xpose.msra.mxu0 0.0
    %412 = vmatprep.subr.mxu0 0.0
    %413 = vmatpush1.xpose.msra.mxu0 0.0
    %414 = vmatprep.subr.mxu0 0.0
    %415 = vmatpush1.xpose.msra.mxu0 0.0
    %416 = vmatprep.subr.mxu0 0.0
    %417 = vmatpush1.xpose.msra.mxu0 0.0
    %418 = vmatprep.subr.mxu0 0.0
    %419 = vmatpush1.xpose.msra.mxu0 0.0
    %420 = vmatprep.subr.mxu0 0.0
    %421 = vmatpush1.xpose.msra.mxu0 0.0
    %422 = vmatprep.subr.mxu0 0.0
    %423 = vmatpush1.xpose.msra.mxu0 0.0
    %424 = vmatprep.subr.mxu0 0.0
    %425 = vmatpush1.xpose.msra.mxu0 0.0
    %426 = vmatprep.subr.mxu0 0.0
    %427 = vmatpush1.xpose.msra.mxu0 0.0
    %428 = vmatprep.subr.mxu0 0.0
    %429 = vmatpush1.xpose.msra.mxu0 0.0
    %430 = vmatprep.subr.mxu0 0.0
    %431 = vmatpush1.xpose.msra.mxu0 0.0
    %432 = vmatprep.subr.mxu0 0.0
    %433 = vmatpush1.xpose.msra.mxu0 %v400
    %434 = vmatprep.subr.mxu0 0.0
    %435 = vmatpush2.xpose.msra.mxu0 0.0
    %436 = vmatprep.subr.mxu0 0.0
    %437 = vmatpush2.xpose.msra.mxu0 0.0
    %438 = vmatprep.subr.mxu0 0.0
    %439 = vmatpush2.xpose.msra.mxu0 0.0
    %440 = vmatprep.subr.mxu0 0.0
    %441 = vmatpush2.xpose.msra.mxu0 0.0
    %442 = vmatprep.subr.mxu0 0.0
    %443 = vmatpush2.xpose.msra.mxu0 0.0
    %444 = vmatprep.subr.mxu0 0.0
    %445 = vmatpush2.xpose.msra.mxu0 0.0
    %446 = vmatprep.subr.mxu0 0.0
    %447 = vmatpush2.xpose.msra.mxu0 0.0
    %448 = vmatprep.subr.mxu0 0.0
    %449 = vmatpush2.xpose.msra.mxu0 0.0
    %450 = vmatprep.subr.mxu0 0.0
    %451 = vmatpush2.xpose.msra.mxu0 0.0
    %452 = vmatprep.subr.mxu0 0.0
    %453 = vmatpush2.xpose.msra.mxu0 0.0
    %454 = vmatprep.subr.mxu0 0.0
    %455 = vmatpush2.xpose.msra.mxu0 0.0
    %456 = vmatprep.subr.mxu0 0.0
    %457 = vmatpush2.xpose.msra.mxu0 0.0
    %458 = vmatprep.subr.mxu0 0.0
    %459 = vmatpush2.xpose.msra.mxu0 0.0
    %460 = vmatprep.subr.mxu0 0.0
    %461 = vmatpush2.xpose.msra.mxu0 0.0
    %462 = vmatprep.subr.mxu0 0.0
    %463 = vmatpush2.xpose.msra.mxu0 0.0
    %464 = vmatprep.subr.mxu0 0.0
    %465 = vmatpush2.xpose.msra.mxu0 0.0
    %466 = vmatprep.mubr.f32.mxu0 0.0
    %467 = vmatmul.mubr.f32.gmra.mxu0 %v397
    %v468 = vpop.f32.mrf.mxu0
    %v469 = vadd.f32 0.0, %v468
    %v470 = vpop.f32.mrf.mxu0
    %471 = vdwg.mxu0
    %v473 = vsel %vm91, %v72, 0
    %v476 = vsel %vm91, %v80, 0
    %478 = vmatprep.subr.mxu0 0.0
    %479 = vmatpush1.xpose.msra.mxu0 0.0
    %480 = vmatprep.subr.mxu0 0.0
    %481 = vmatpush1.xpose.msra.mxu0 0.0
    %482 = vmatprep.subr.mxu0 0.0
    %483 = vmatpush1.xpose.msra.mxu0 0.0
    %484 = vmatprep.subr.mxu0 0.0
    %485 = vmatpush1.xpose.msra.mxu0 0.0
    %486 = vmatprep.subr.mxu0 0.0
    %487 = vmatpush1.xpose.msra.mxu0 0.0
    %488 = vmatprep.subr.mxu0 0.0
    %489 = vmatpush1.xpose.msra.mxu0 0.0
    %490 = vmatprep.subr.mxu0 0.0
    %491 = vmatpush1.xpose.msra.mxu0 0.0
    %492 = vmatprep.subr.mxu0 0.0
    %493 = vmatpush1.xpose.msra.mxu0 0.0
    %494 = vmatprep.subr.mxu0 0.0
    %495 = vmatpush1.xpose.msra.mxu0 0.0
    %496 = vmatprep.subr.mxu0 0.0
    %497 = vmatpush1.xpose.msra.mxu0 0.0
    %498 = vmatprep.subr.mxu0 0.0
    %499 = vmatpush1.xpose.msra.mxu0 0.0
    %500 = vmatprep.subr.mxu0 0.0
    %501 = vmatpush1.xpose.msra.mxu0 0.0
    %502 = vmatprep.subr.mxu0 0.0
    %503 = vmatpush1.xpose.msra.mxu0 0.0
    %504 = vmatprep.subr.mxu0 0.0
    %505 = vmatpush1.xpose.msra.mxu0 0.0
    %506 = vmatprep.subr.mxu0 0.0
    %507 = vmatpush1.xpose.msra.mxu0 0.0
    %508 = vmatprep.subr.mxu0 0.0
    %509 = vmatpush1.xpose.msra.mxu0 %v476
    %510 = vmatprep.subr.mxu0 0.0
    %511 = vmatpush2.xpose.msra.mxu0 0.0
    %512 = vmatprep.subr.mxu0 0.0
    %513 = vmatpush2.xpose.msra.mxu0 0.0
    %514 = vmatprep.subr.mxu0 0.0
    %515 = vmatpush2.xpose.msra.mxu0 0.0
    %516 = vmatprep.subr.mxu0 0.0
    %517 = vmatpush2.xpose.msra.mxu0 0.0
    %518 = vmatprep.subr.mxu0 0.0
    %519 = vmatpush2.xpose.msra.mxu0 0.0
    %520 = vmatprep.subr.mxu0 0.0
    %521 = vmatpush2.xpose.msra.mxu0 0.0
    %522 = vmatprep.subr.mxu0 0.0
    %523 = vmatpush2.xpose.msra.mxu0 0.0
    %524 = vmatprep.subr.mxu0 0.0
    %525 = vmatpush2.xpose.msra.mxu0 0.0
    %526 = vmatprep.subr.mxu0 0.0
    %527 = vmatpush2.xpose.msra.mxu0 0.0
    %528 = vmatprep.subr.mxu0 0.0
    %529 = vmatpush2.xpose.msra.mxu0 0.0
    %530 = vmatprep.subr.mxu0 0.0
    %531 = vmatpush2.xpose.msra.mxu0 0.0
    %532 = vmatprep.subr.mxu0 0.0
    %533 = vmatpush2.xpose.msra.mxu0 0.0
    %534 = vmatprep.subr.mxu0 0.0
    %535 = vmatpush2.xpose.msra.mxu0 0.0
    %536 = vmatprep.subr.mxu0 0.0
    %537 = vmatpush2.xpose.msra.mxu0 0.0
    %538 = vmatprep.subr.mxu0 0.0
    %539 = vmatpush2.xpose.msra.mxu0 0.0
    %540 = vmatprep.subr.mxu0 0.0
    %541 = vmatpush2.xpose.msra.mxu0 0.0
    %542 = vmatprep.mubr.f32.mxu0 0.0
    %543 = vmatmul.mubr.f32.gmra.mxu0 %v473
    %v544 = vpop.f32.mrf.mxu0
    %v545 = vadd.f32 0.0, %v544
    %v546 = vpop.f32.mrf.mxu0
    %547 = vdwg.mxu0
    %v549 = vsel %vm91, %v73, 0
    %v552 = vsel %vm91, %v81, 0
    %554 = vmatprep.subr.mxu0 0.0
    %555 = vmatpush1.xpose.msra.mxu0 0.0
    %556 = vmatprep.subr.mxu0 0.0
    %557 = vmatpush1.xpose.msra.mxu0 0.0
    %558 = vmatprep.subr.mxu0 0.0
    %559 = vmatpush1.xpose.msra.mxu0 0.0
    %560 = vmatprep.subr.mxu0 0.0
    %561 = vmatpush1.xpose.msra.mxu0 0.0
    %562 = vmatprep.subr.mxu0 0.0
    %563 = vmatpush1.xpose.msra.mxu0 0.0
    %564 = vmatprep.subr.mxu0 0.0
    %565 = vmatpush1.xpose.msra.mxu0 0.0
    %566 = vmatprep.subr.mxu0 0.0
    %567 = vmatpush1.xpose.msra.mxu0 0.0
    %568 = vmatprep.subr.mxu0 0.0
    %569 = vmatpush1.xpose.msra.mxu0 0.0
    %570 = vmatprep.subr.mxu0 0.0
    %571 = vmatpush1.xpose.msra.mxu0 0.0
    %572 = vmatprep.subr.mxu0 0.0
    %573 = vmatpush1.xpose.msra.mxu0 0.0
    %574 = vmatprep.subr.mxu0 0.0
    %575 = vmatpush1.xpose.msra.mxu0 0.0
    %576 = vmatprep.subr.mxu0 0.0
    %577 = vmatpush1.xpose.msra.mxu0 0.0
    %578 = vmatprep.subr.mxu0 0.0
    %579 = vmatpush1.xpose.msra.mxu0 0.0
    %580 = vmatprep.subr.mxu0 0.0
    %581 = vmatpush1.xpose.msra.mxu0 0.0
    %582 = vmatprep.subr.mxu0 0.0
    %583 = vmatpush1.xpose.msra.mxu0 0.0
    %584 = vmatprep.subr.mxu0 0.0
    %585 = vmatpush1.xpose.msra.mxu0 %v552
    %586 = vmatprep.subr.mxu0 0.0
    %587 = vmatpush2.xpose.msra.mxu0 0.0
    %588 = vmatprep.subr.mxu0 0.0
    %589 = vmatpush2.xpose.msra.mxu0 0.0
    %590 = vmatprep.subr.mxu0 0.0
    %591 = vmatpush2.xpose.msra.mxu0 0.0
    %592 = vmatprep.subr.mxu0 0.0
    %593 = vmatpush2.xpose.msra.mxu0 0.0
    %594 = vmatprep.subr.mxu0 0.0
    %595 = vmatpush2.xpose.msra.mxu0 0.0
    %596 = vmatprep.subr.mxu0 0.0
    %597 = vmatpush2.xpose.msra.mxu0 0.0
    %598 = vmatprep.subr.mxu0 0.0
    %599 = vmatpush2.xpose.msra.mxu0 0.0
    %600 = vmatprep.subr.mxu0 0.0
    %601 = vmatpush2.xpose.msra.mxu0 0.0
    %602 = vmatprep.subr.mxu0 0.0
    %603 = vmatpush2.xpose.msra.mxu0 0.0
    %604 = vmatprep.subr.mxu0 0.0
    %605 = vmatpush2.xpose.msra.mxu0 0.0
    %606 = vmatprep.subr.mxu0 0.0
    %607 = vmatpush2.xpose.msra.mxu0 0.0
    %608 = vmatprep.subr.mxu0 0.0
    %609 = vmatpush2.xpose.msra.mxu0 0.0
    %610 = vmatprep.subr.mxu0 0.0
    %611 = vmatpush2.xpose.msra.mxu0 0.0
    %612 = vmatprep.subr.mxu0 0.0
    %613 = vmatpush2.xpose.msra.mxu0 0.0
    %614 = vmatprep.subr.mxu0 0.0
    %615 = vmatpush2.xpose.msra.mxu0 0.0
    %616 = vmatprep.subr.mxu0 0.0
    %617 = vmatpush2.xpose.msra.mxu0 0.0
    %618 = vmatprep.mubr.f32.mxu0 0.0
    %619 = vmatmul.mubr.f32.gmra.mxu0 %v549
    %v620 = vpop.f32.mrf.mxu0
    %v621 = vadd.f32 0.0, %v620
    %v622 = vpop.f32.mrf.mxu0
    %623 = vdwg.mxu0
    %v625 = vsel %vm91, %v74, 0
    %v628 = vsel %vm91, %v82, 0
    %630 = vmatprep.subr.mxu0 0.0
    %631 = vmatpush1.xpose.msra.mxu0 0.0
    %632 = vmatprep.subr.mxu0 0.0
    %633 = vmatpush1.xpose.msra.mxu0 0.0
    %634 = vmatprep.subr.mxu0 0.0
    %635 = vmatpush1.xpose.msra.mxu0 0.0
    %636 = vmatprep.subr.mxu0 0.0
    %637 = vmatpush1.xpose.msra.mxu0 0.0
    %638 = vmatprep.subr.mxu0 0.0
    %639 = vmatpush1.xpose.msra.mxu0 0.0
    %640 = vmatprep.subr.mxu0 0.0
    %641 = vmatpush1.xpose.msra.mxu0 0.0
    %642 = vmatprep.subr.mxu0 0.0
    %643 = vmatpush1.xpose.msra.mxu0 0.0
    %644 = vmatprep.subr.mxu0 0.0
    %645 = vmatpush1.xpose.msra.mxu0 0.0
    %646 = vmatprep.subr.mxu0 0.0
    %647 = vmatpush1.xpose.msra.mxu0 0.0
    %648 = vmatprep.subr.mxu0 0.0
    %649 = vmatpush1.xpose.msra.mxu0 0.0
    %650 = vmatprep.subr.mxu0 0.0
    %651 = vmatpush1.xpose.msra.mxu0 0.0
    %652 = vmatprep.subr.mxu0 0.0
    %653 = vmatpush1.xpose.msra.mxu0 0.0
    %654 = vmatprep.subr.mxu0 0.0
    %655 = vmatpush1.xpose.msra.mxu0 0.0
    %656 = vmatprep.subr.mxu0 0.0
    %657 = vmatpush1.xpose.msra.mxu0 0.0
    %658 = vmatprep.subr.mxu0 0.0
    %659 = vmatpush1.xpose.msra.mxu0 0.0
    %660 = vmatprep.subr.mxu0 0.0
    %661 = vmatpush1.xpose.msra.mxu0 %v628
    %662 = vmatprep.subr.mxu0 0.0
    %663 = vmatpush2.xpose.msra.mxu0 0.0
    %664 = vmatprep.subr.mxu0 0.0
    %665 = vmatpush2.xpose.msra.mxu0 0.0
    %666 = vmatprep.subr.mxu0 0.0
    %667 = vmatpush2.xpose.msra.mxu0 0.0
    %668 = vmatprep.subr.mxu0 0.0
    %669 = vmatpush2.xpose.msra.mxu0 0.0
    %670 = vmatprep.subr.mxu0 0.0
    %671 = vmatpush2.xpose.msra.mxu0 0.0
    %672 = vmatprep.subr.mxu0 0.0
    %673 = vmatpush2.xpose.msra.mxu0 0.0
    %674 = vmatprep.subr.mxu0 0.0
    %675 = vmatpush2.xpose.msra.mxu0 0.0
    %676 = vmatprep.subr.mxu0 0.0
    %677 = vmatpush2.xpose.msra.mxu0 0.0
    %678 = vmatprep.subr.mxu0 0.0
    %679 = vmatpush2.xpose.msra.mxu0 0.0
    %680 = vmatprep.subr.mxu0 0.0
    %681 = vmatpush2.xpose.msra.mxu0 0.0
    %682 = vmatprep.subr.mxu0 0.0
    %683 = vmatpush2.xpose.msra.mxu0 0.0
    %684 = vmatprep.subr.mxu0 0.0
    %685 = vmatpush2.xpose.msra.mxu0 0.0
    %686 = vmatprep.subr.mxu0 0.0
    %687 = vmatpush2.xpose.msra.mxu0 0.0
    %688 = vmatprep.subr.mxu0 0.0
    %689 = vmatpush2.xpose.msra.mxu0 0.0
    %690 = vmatprep.subr.mxu0 0.0
    %691 = vmatpush2.xpose.msra.mxu0 0.0
    %692 = vmatprep.subr.mxu0 0.0
    %693 = vmatpush2.xpose.msra.mxu0 0.0
    %694 = vmatprep.mubr.f32.mxu0 0.0
    %695 = vmatmul.mubr.f32.gmra.mxu0 %v625
    %v696 = vpop.f32.mrf.mxu0
    %v697 = vadd.f32 0.0, %v696
    %v698 = vpop.f32.mrf.mxu0
    %699 = vdwg.mxu0
    %vm700 = vcmask 64512
    %v701 = vsel %vm700, %v165, -inf
    %702 = vmax.xlane.f32.xlu0 %v701
    %v703 = vpop.xlane.xlu0 %702
    %v704 = vsel %vm700, %v241, -inf
    %705 = vmax.xlane.f32.xlu0 %v704
    %v706 = vpop.xlane.xlu0 %705
    %v707 = vsel %vm700, %v317, -inf
    %708 = vmax.xlane.f32.xlu0 %v707
    %v709 = vpop.xlane.xlu0 %708
    %v710 = vsel %vm700, %v393, -inf
    %711 = vmax.xlane.f32.xlu0 %v710
    %v712 = vpop.xlane.xlu0 %711
    %v713 = vsel %vm700, %v469, -inf
    %714 = vmax.xlane.f32.xlu0 %v713
    %v715 = vpop.xlane.xlu0 %714
    %v716 = vsel %vm700, %v545, -inf
    %717 = vmax.xlane.f32.xlu0 %v716
    %v718 = vpop.xlane.xlu0 %717
    %v719 = vsel %vm700, %v621, -inf
    %720 = vmax.xlane.f32.xlu0 %v719
    %v721 = vpop.xlane.xlu0 %720
    %v722 = vsel %vm700, %v697, -inf
    %723 = vmax.xlane.f32.xlu0 %v722
    %v724 = vpop.xlane.xlu0 %723
    %v725 = vsub.f32 %v165, %v703
    %v726 = vsub.f32 %v241, %v706
    %v727 = vsub.f32 %v317, %v709
    %v728 = vsub.f32 %v393, %v712
    %v729 = vsub.f32 %v469, %v715
    %v730 = vsub.f32 %v545, %v718
    %v731 = vsub.f32 %v621, %v721
    %v732 = vsub.f32 %v697, %v724
    %v733 = vmul.f32 %v725, 1.442695
    %v734 = vpow.pop %v733
    %v735 = vmul.f32 %v726, 1.442695
    %v736 = vpow.pop %v735
    %v737 = vmul.f32 %v727, 1.442695
    %v738 = vpow.pop %v737
    %v739 = vmul.f32 %v728, 1.442695
    %v740 = vpow.pop %v739
    %v741 = vmul.f32 %v729, 1.442695
    %v742 = vpow.pop %v741
    %v743 = vmul.f32 %v730, 1.442695
    %v744 = vpow.pop %v743
    %v745 = vmul.f32 %v731, 1.442695
    %v746 = vpow.pop %v745
    %v747 = vmul.f32 %v732, 1.442695
    %v748 = vpow.pop %v747
    %v749 = vsel %vm700, %v734, 0.0
    %750 = vadd.xlane.f32.xlu0 %v749
    %v751 = vpop.xlane.xlu0 %750
    %v752 = vsel %vm700, %v736, 0.0
    %753 = vadd.xlane.f32.xlu0 %v752
    %v754 = vpop.xlane.xlu0 %753
    %v755 = vsel %vm700, %v738, 0.0
    %756 = vadd.xlane.f32.xlu0 %v755
    %v757 = vpop.xlane.xlu0 %756
    %v758 = vsel %vm700, %v740, 0.0
    %759 = vadd.xlane.f32.xlu0 %v758
    %v760 = vpop.xlane.xlu0 %759
    %v761 = vsel %vm700, %v742, 0.0
    %762 = vadd.xlane.f32.xlu0 %v761
    %v763 = vpop.xlane.xlu0 %762
    %v764 = vsel %vm700, %v744, 0.0
    %765 = vadd.xlane.f32.xlu0 %v764
    %v766 = vpop.xlane.xlu0 %765
    %v767 = vsel %vm700, %v746, 0.0
    %768 = vadd.xlane.f32.xlu0 %v767
    %v769 = vpop.xlane.xlu0 %768
    %v770 = vsel %vm700, %v748, 0.0
    %771 = vadd.xlane.f32.xlu0 %v770
    %v772 = vpop.xlane.xlu0 %771
    %v773 = vrcp.pop %v751
    %v774 = vmul.f32 %v734, %v773
    %v775 = vrcp.pop %v754
    %v776 = vmul.f32 %v736, %v775
    %v777 = vrcp.pop %v757
    %v778 = vmul.f32 %v738, %v777
    %v779 = vrcp.pop %v760
    %v780 = vmul.f32 %v740, %v779
    %v781 = vrcp.pop %v763
    %v782 = vmul.f32 %v742, %v781
    %v783 = vrcp.pop %v766
    %v784 = vmul.f32 %v744, %v783
    %v785 = vrcp.pop %v769
    %v786 = vmul.f32 %v746, %v785
    %v787 = vrcp.pop %v772
    %v788 = vmul.f32 %v748, %v787
    %v790 = vsel %vm700, %v774, 0
    %792 = vmatprep.subr.mxu0 0.0
    %793 = vmatpush1.msra.mxu0 0.0
    %794 = vmatprep.subr.mxu0 0.0
    %795 = vmatpush1.msra.mxu0 0.0
    %796 = vmatprep.subr.mxu0 0.0
    %797 = vmatpush1.msra.mxu0 0.0
    %798 = vmatprep.subr.mxu0 0.0
    %799 = vmatpush1.msra.mxu0 0.0
    %800 = vmatprep.subr.mxu0 0.0
    %801 = vmatpush1.msra.mxu0 0.0
    %802 = vmatprep.subr.mxu0 0.0
    %803 = vmatpush1.msra.mxu0 0.0
    %804 = vmatprep.subr.mxu0 0.0
    %805 = vmatpush1.msra.mxu0 0.0
    %806 = vmatprep.subr.mxu0 0.0
    %807 = vmatpush1.msra.mxu0 0.0
    %808 = vmatprep.subr.mxu0 0.0
    %809 = vmatpush1.msra.mxu0 0.0
    %810 = vmatprep.subr.mxu0 0.0
    %811 = vmatpush1.msra.mxu0 0.0
    %812 = vmatprep.subr.mxu0 0.0
    %813 = vmatpush1.msra.mxu0 0.0
    %814 = vmatprep.subr.mxu0 0.0
    %815 = vmatpush1.msra.mxu0 0.0
    %816 = vmatprep.subr.mxu0 0.0
    %817 = vmatpush1.msra.mxu0 0.0
    %818 = vmatprep.subr.mxu0 0.0
    %819 = vmatpush1.msra.mxu0 0.0
    %820 = vmatprep.subr.mxu0 0.0
    %821 = vmatpush1.msra.mxu0 0.0
    %822 = vmatprep.subr.mxu0 0.0
    %823 = vmatpush1.msra.mxu0 %v83
    %824 = vmatprep.subr.mxu0 0.0
    %825 = vmatpush2.msra.mxu0 0.0
    %826 = vmatprep.subr.mxu0 0.0
    %827 = vmatpush2.msra.mxu0 0.0
    %828 = vmatprep.subr.mxu0 0.0
    %829 = vmatpush2.msra.mxu0 0.0
    %830 = vmatprep.subr.mxu0 0.0
    %831 = vmatpush2.msra.mxu0 0.0
    %832 = vmatprep.subr.mxu0 0.0
    %833 = vmatpush2.msra.mxu0 0.0
    %834 = vmatprep.subr.mxu0 0.0
    %835 = vmatpush2.msra.mxu0 0.0
    %836 = vmatprep.subr.mxu0 0.0
    %837 = vmatpush2.msra.mxu0 0.0
    %838 = vmatprep.subr.mxu0 0.0
    %839 = vmatpush2.msra.mxu0 0.0
    %840 = vmatprep.subr.mxu0 0.0
    %841 = vmatpush2.msra.mxu0 0.0
    %842 = vmatprep.subr.mxu0 0.0
    %843 = vmatpush2.msra.mxu0 0.0
    %844 = vmatprep.subr.mxu0 0.0
    %845 = vmatpush2.msra.mxu0 0.0
    %846 = vmatprep.subr.mxu0 0.0
    %847 = vmatpush2.msra.mxu0 0.0
    %848 = vmatprep.subr.mxu0 0.0
    %849 = vmatpush2.msra.mxu0 0.0
    %850 = vmatprep.subr.mxu0 0.0
    %851 = vmatpush2.msra.mxu0 0.0
    %852 = vmatprep.subr.mxu0 0.0
    %853 = vmatpush2.msra.mxu0 0.0
    %854 = vmatprep.subr.mxu0 0.0
    %855 = vmatpush2.msra.mxu0 0.0
    %856 = vmatprep.mubr.f32.mxu0 0.0
    %857 = vmatmul.mubr.f32.gmra.mxu0 %v790
    %v858 = vpop.f32.mrf.mxu0
    %v859 = vadd.f32 0.0, %v858
    %v860 = vpop.f32.mrf.mxu0
    %861 = vdwg.mxu0
    %v863 = vsel %vm700, %v776, 0
    %865 = vmatprep.subr.mxu0 0.0
    %866 = vmatpush1.msra.mxu0 0.0
    %867 = vmatprep.subr.mxu0 0.0
    %868 = vmatpush1.msra.mxu0 0.0
    %869 = vmatprep.subr.mxu0 0.0
    %870 = vmatpush1.msra.mxu0 0.0
    %871 = vmatprep.subr.mxu0 0.0
    %872 = vmatpush1.msra.mxu0 0.0
    %873 = vmatprep.subr.mxu0 0.0
    %874 = vmatpush1.msra.mxu0 0.0
    %875 = vmatprep.subr.mxu0 0.0
    %876 = vmatpush1.msra.mxu0 0.0
    %877 = vmatprep.subr.mxu0 0.0
    %878 = vmatpush1.msra.mxu0 0.0
    %879 = vmatprep.subr.mxu0 0.0
    %880 = vmatpush1.msra.mxu0 0.0
    %881 = vmatprep.subr.mxu0 0.0
    %882 = vmatpush1.msra.mxu0 0.0
    %883 = vmatprep.subr.mxu0 0.0
    %884 = vmatpush1.msra.mxu0 0.0
    %885 = vmatprep.subr.mxu0 0.0
    %886 = vmatpush1.msra.mxu0 0.0
    %887 = vmatprep.subr.mxu0 0.0
    %888 = vmatpush1.msra.mxu0 0.0
    %889 = vmatprep.subr.mxu0 0.0
    %890 = vmatpush1.msra.mxu0 0.0
    %891 = vmatprep.subr.mxu0 0.0
    %892 = vmatpush1.msra.mxu0 0.0
    %893 = vmatprep.subr.mxu0 0.0
    %894 = vmatpush1.msra.mxu0 0.0
    %895 = vmatprep.subr.mxu0 0.0
    %896 = vmatpush1.msra.mxu0 %v84
    %897 = vmatprep.subr.mxu0 0.0
    %898 = vmatpush2.msra.mxu0 0.0
    %899 = vmatprep.subr.mxu0 0.0
    %900 = vmatpush2.msra.mxu0 0.0
    %901 = vmatprep.subr.mxu0 0.0
    %902 = vmatpush2.msra.mxu0 0.0
    %903 = vmatprep.subr.mxu0 0.0
    %904 = vmatpush2.msra.mxu0 0.0
    %905 = vmatprep.subr.mxu0 0.0
    %906 = vmatpush2.msra.mxu0 0.0
    %907 = vmatprep.subr.mxu0 0.0
    %908 = vmatpush2.msra.mxu0 0.0
    %909 = vmatprep.subr.mxu0 0.0
    %910 = vmatpush2.msra.mxu0 0.0
    %911 = vmatprep.subr.mxu0 0.0
    %912 = vmatpush2.msra.mxu0 0.0
    %913 = vmatprep.subr.mxu0 0.0
    %914 = vmatpush2.msra.mxu0 0.0
    %915 = vmatprep.subr.mxu0 0.0
    %916 = vmatpush2.msra.mxu0 0.0
    %917 = vmatprep.subr.mxu0 0.0
    %918 = vmatpush2.msra.mxu0 0.0
    %919 = vmatprep.subr.mxu0 0.0
    %920 = vmatpush2.msra.mxu0 0.0
    %921 = vmatprep.subr.mxu0 0.0
    %922 = vmatpush2.msra.mxu0 0.0
    %923 = vmatprep.subr.mxu0 0.0
    %924 = vmatpush2.msra.mxu0 0.0
    %925 = vmatprep.subr.mxu0 0.0
    %926 = vmatpush2.msra.mxu0 0.0
    %927 = vmatprep.subr.mxu0 0.0
    %928 = vmatpush2.msra.mxu0 0.0
    %929 = vmatprep.mubr.f32.mxu0 0.0
    %930 = vmatmul.mubr.f32.gmra.mxu0 %v863
    %v931 = vpop.f32.mrf.mxu0
    %v932 = vadd.f32 0.0, %v931
    %v933 = vpop.f32.mrf.mxu0
    %934 = vdwg.mxu0
    %v936 = vsel %vm700, %v778, 0
    %938 = vmatprep.subr.mxu0 0.0
    %939 = vmatpush1.msra.mxu0 0.0
    %940 = vmatprep.subr.mxu0 0.0
    %941 = vmatpush1.msra.mxu0 0.0
    %942 = vmatprep.subr.mxu0 0.0
    %943 = vmatpush1.msra.mxu0 0.0
    %944 = vmatprep.subr.mxu0 0.0
    %945 = vmatpush1.msra.mxu0 0.0
    %946 = vmatprep.subr.mxu0 0.0
    %947 = vmatpush1.msra.mxu0 0.0
    %948 = vmatprep.subr.mxu0 0.0
    %949 = vmatpush1.msra.mxu0 0.0
    %950 = vmatprep.subr.mxu0 0.0
    %951 = vmatpush1.msra.mxu0 0.0
    %952 = vmatprep.subr.mxu0 0.0
    %953 = vmatpush1.msra.mxu0 0.0
    %954 = vmatprep.subr.mxu0 0.0
    %955 = vmatpush1.msra.mxu0 0.0
    %956 = vmatprep.subr.mxu0 0.0
    %957 = vmatpush1.msra.mxu0 0.0
    %958 = vmatprep.subr.mxu0 0.0
    %959 = vmatpush1.msra.mxu0 0.0
    %960 = vmatprep.subr.mxu0 0.0
    %961 = vmatpush1.msra.mxu0 0.0
    %962 = vmatprep.subr.mxu0 0.0
    %963 = vmatpush1.msra.mxu0 0.0
    %964 = vmatprep.subr.mxu0 0.0
    %965 = vmatpush1.msra.mxu0 0.0
    %966 = vmatprep.subr.mxu0 0.0
    %967 = vmatpush1.msra.mxu0 0.0
    %968 = vmatprep.subr.mxu0 0.0
    %969 = vmatpush1.msra.mxu0 %v85
    %970 = vmatprep.subr.mxu0 0.0
    %971 = vmatpush2.msra.mxu0 0.0
    %972 = vmatprep.subr.mxu0 0.0
    %973 = vmatpush2.msra.mxu0 0.0
    %974 = vmatprep.subr.mxu0 0.0
    %975 = vmatpush2.msra.mxu0 0.0
    %976 = vmatprep.subr.mxu0 0.0
    %977 = vmatpush2.msra.mxu0 0.0
    %978 = vmatprep.subr.mxu0 0.0
    %979 = vmatpush2.msra.mxu0 0.0
    %980 = vmatprep.subr.mxu0 0.0
    %981 = vmatpush2.msra.mxu0 0.0
    %982 = vmatprep.subr.mxu0 0.0
    %983 = vmatpush2.msra.mxu0 0.0
    %984 = vmatprep.subr.mxu0 0.0
    %985 = vmatpush2.msra.mxu0 0.0
    %986 = vmatprep.subr.mxu0 0.0
    %987 = vmatpush2.msra.mxu0 0.0
    %988 = vmatprep.subr.mxu0 0.0
    %989 = vmatpush2.msra.mxu0 0.0
    %990 = vmatprep.subr.mxu0 0.0
    %991 = vmatpush2.msra.mxu0 0.0
    %992 = vmatprep.subr.mxu0 0.0
    %993 = vmatpush2.msra.mxu0 0.0
    %994 = vmatprep.subr.mxu0 0.0
    %995 = vmatpush2.msra.mxu0 0.0
    %996 = vmatprep.subr.mxu0 0.0
    %997 = vmatpush2.msra.mxu0 0.0
    %998 = vmatprep.subr.mxu0 0.0
    %999 = vmatpush2.msra.mxu0 0.0
    %1000 = vmatprep.subr.mxu0 0.0
    %1001 = vmatpush2.msra.mxu0 0.0
    %1002 = vmatprep.mubr.f32.mxu0 0.0
    %1003 = vmatmul.mubr.f32.gmra.mxu0 %v936
    %v1004 = vpop.f32.mrf.mxu0
    %v1005 = vadd.f32 0.0, %v1004
    %v1006 = vpop.f32.mrf.mxu0
    %1007 = vdwg.mxu0
    %v1009 = vsel %vm700, %v780, 0
    %1011 = vmatprep.subr.mxu0 0.0
    %1012 = vmatpush1.msra.mxu0 0.0
    %1013 = vmatprep.subr.mxu0 0.0
    %1014 = vmatpush1.msra.mxu0 0.0
    %1015 = vmatprep.subr.mxu0 0.0
    %1016 = vmatpush1.msra.mxu0 0.0
    %1017 = vmatprep.subr.mxu0 0.0
    %1018 = vmatpush1.msra.mxu0 0.0
    %1019 = vmatprep.subr.mxu0 0.0
    %1020 = vmatpush1.msra.mxu0 0.0
    %1021 = vmatprep.subr.mxu0 0.0
    %1022 = vmatpush1.msra.mxu0 0.0
    %1023 = vmatprep.subr.mxu0 0.0
    %1024 = vmatpush1.msra.mxu0 0.0
    %1025 = vmatprep.subr.mxu0 0.0
    %1026 = vmatpush1.msra.mxu0 0.0
    %1027 = vmatprep.subr.mxu0 0.0
    %1028 = vmatpush1.msra.mxu0 0.0
    %1029 = vmatprep.subr.mxu0 0.0
    %1030 = vmatpush1.msra.mxu0 0.0
    %1031 = vmatprep.subr.mxu0 0.0
    %1032 = vmatpush1.msra.mxu0 0.0
    %1033 = vmatprep.subr.mxu0 0.0
    %1034 = vmatpush1.msra.mxu0 0.0
    %1035 = vmatprep.subr.mxu0 0.0
    %1036 = vmatpush1.msra.mxu0 0.0
    %1037 = vmatprep.subr.mxu0 0.0
    %1038 = vmatpush1.msra.mxu0 0.0
    %1039 = vmatprep.subr.mxu0 0.0
    %1040 = vmatpush1.msra.mxu0 0.0
    %1041 = vmatprep.subr.mxu0 0.0
    %1042 = vmatpush1.msra.mxu0 %v86
    %1043 = vmatprep.subr.mxu0 0.0
    %1044 = vmatpush2.msra.mxu0 0.0
    %1045 = vmatprep.subr.mxu0 0.0
    %1046 = vmatpush2.msra.mxu0 0.0
    %1047 = vmatprep.subr.mxu0 0.0
    %1048 = vmatpush2.msra.mxu0 0.0
    %1049 = vmatprep.subr.mxu0 0.0
    %1050 = vmatpush2.msra.mxu0 0.0
    %1051 = vmatprep.subr.mxu0 0.0
    %1052 = vmatpush2.msra.mxu0 0.0
    %1053 = vmatprep.subr.mxu0 0.0
    %1054 = vmatpush2.msra.mxu0 0.0
    %1055 = vmatprep.subr.mxu0 0.0
    %1056 = vmatpush2.msra.mxu0 0.0
    %1057 = vmatprep.subr.mxu0 0.0
    %1058 = vmatpush2.msra.mxu0 0.0
    %1059 = vmatprep.subr.mxu0 0.0
    %1060 = vmatpush2.msra.mxu0 0.0
    %1061 = vmatprep.subr.mxu0 0.0
    %1062 = vmatpush2.msra.mxu0 0.0
    %1063 = vmatprep.subr.mxu0 0.0
    %1064 = vmatpush2.msra.mxu0 0.0
    %1065 = vmatprep.subr.mxu0 0.0
    %1066 = vmatpush2.msra.mxu0 0.0
    %1067 = vmatprep.subr.mxu0 0.0
    %1068 = vmatpush2.msra.mxu0 0.0
    %1069 = vmatprep.subr.mxu0 0.0
    %1070 = vmatpush2.msra.mxu0 0.0
    %1071 = vmatprep.subr.mxu0 0.0
    %1072 = vmatpush2.msra.mxu0 0.0
    %1073 = vmatprep.subr.mxu0 0.0
    %1074 = vmatpush2.msra.mxu0 0.0
    %1075 = vmatprep.mubr.f32.mxu0 0.0
    %1076 = vmatmul.mubr.f32.gmra.mxu0 %v1009
    %v1077 = vpop.f32.mrf.mxu0
    %v1078 = vadd.f32 0.0, %v1077
    %v1079 = vpop.f32.mrf.mxu0
    %1080 = vdwg.mxu0
    %v1082 = vsel %vm700, %v782, 0
    %1084 = vmatprep.subr.mxu0 0.0
    %1085 = vmatpush1.msra.mxu0 0.0
    %1086 = vmatprep.subr.mxu0 0.0
    %1087 = vmatpush1.msra.mxu0 0.0
    %1088 = vmatprep.subr.mxu0 0.0
    %1089 = vmatpush1.msra.mxu0 0.0
    %1090 = vmatprep.subr.mxu0 0.0
    %1091 = vmatpush1.msra.mxu0 0.0
    %1092 = vmatprep.subr.mxu0 0.0
    %1093 = vmatpush1.msra.mxu0 0.0
    %1094 = vmatprep.subr.mxu0 0.0
    %1095 = vmatpush1.msra.mxu0 0.0
    %1096 = vmatprep.subr.mxu0 0.0
    %1097 = vmatpush1.msra.mxu0 0.0
    %1098 = vmatprep.subr.mxu0 0.0
    %1099 = vmatpush1.msra.mxu0 0.0
    %1100 = vmatprep.subr.mxu0 0.0
    %1101 = vmatpush1.msra.mxu0 0.0
    %1102 = vmatprep.subr.mxu0 0.0
    %1103 = vmatpush1.msra.mxu0 0.0
    %1104 = vmatprep.subr.mxu0 0.0
    %1105 = vmatpush1.msra.mxu0 0.0
    %1106 = vmatprep.subr.mxu0 0.0
    %1107 = vmatpush1.msra.mxu0 0.0
    %1108 = vmatprep.subr.mxu0 0.0
    %1109 = vmatpush1.msra.mxu0 0.0
    %1110 = vmatprep.subr.mxu0 0.0
    %1111 = vmatpush1.msra.mxu0 0.0
    %1112 = vmatprep.subr.mxu0 0.0
    %1113 = vmatpush1.msra.mxu0 0.0
    %1114 = vmatprep.subr.mxu0 0.0
    %1115 = vmatpush1.msra.mxu0 %v87
    %1116 = vmatprep.subr.mxu0 0.0
    %1117 = vmatpush2.msra.mxu0 0.0
    %1118 = vmatprep.subr.mxu0 0.0
    %1119 = vmatpush2.msra.mxu0 0.0
    %1120 = vmatprep.subr.mxu0 0.0
    %1121 = vmatpush2.msra.mxu0 0.0
    %1122 = vmatprep.subr.mxu0 0.0
    %1123 = vmatpush2.msra.mxu0 0.0
    %1124 = vmatprep.subr.mxu0 0.0
    %1125 = vmatpush2.msra.mxu0 0.0
    %1126 = vmatprep.subr.mxu0 0.0
    %1127 = vmatpush2.msra.mxu0 0.0
    %1128 = vmatprep.subr.mxu0 0.0
    %1129 = vmatpush2.msra.mxu0 0.0
    %1130 = vmatprep.subr.mxu0 0.0
    %1131 = vmatpush2.msra.mxu0 0.0
    %1132 = vmatprep.subr.mxu0 0.0
    %1133 = vmatpush2.msra.mxu0 0.0
    %1134 = vmatprep.subr.mxu0 0.0
    %1135 = vmatpush2.msra.mxu0 0.0
    %1136 = vmatprep.subr.mxu0 0.0
    %1137 = vmatpush2.msra.mxu0 0.0
    %1138 = vmatprep.subr.mxu0 0.0
    %1139 = vmatpush2.msra.mxu0 0.0
    %1140 = vmatprep.subr.mxu0 0.0
    %1141 = vmatpush2.msra.mxu0 0.0
    %1142 = vmatprep.subr.mxu0 0.0
    %1143 = vmatpush2.msra.mxu0 0.0
    %1144 = vmatprep.subr.mxu0 0.0
    %1145 = vmatpush2.msra.mxu0 0.0
    %1146 = vmatprep.subr.mxu0 0.0
    %1147 = vmatpush2.msra.mxu0 0.0
    %1148 = vmatprep.mubr.f32.mxu0 0.0
    %1149 = vmatmul.mubr.f32.gmra.mxu0 %v1082
    %v1150 = vpop.f32.mrf.mxu0
    %v1151 = vadd.f32 0.0, %v1150
    %v1152 = vpop.f32.mrf.mxu0
    %1153 = vdwg.mxu0
    %v1155 = vsel %vm700, %v784, 0
    %1157 = vmatprep.subr.mxu0 0.0
    %1158 = vmatpush1.msra.mxu0 0.0
    %1159 = vmatprep.subr.mxu0 0.0
    %1160 = vmatpush1.msra.mxu0 0.0
    %1161 = vmatprep.subr.mxu0 0.0
    %1162 = vmatpush1.msra.mxu0 0.0
    %1163 = vmatprep.subr.mxu0 0.0
    %1164 = vmatpush1.msra.mxu0 0.0
    %1165 = vmatprep.subr.mxu0 0.0
    %1166 = vmatpush1.msra.mxu0 0.0
    %1167 = vmatprep.subr.mxu0 0.0
    %1168 = vmatpush1.msra.mxu0 0.0
    %1169 = vmatprep.subr.mxu0 0.0
    %1170 = vmatpush1.msra.mxu0 0.0
    %1171 = vmatprep.subr.mxu0 0.0
    %1172 = vmatpush1.msra.mxu0 0.0
    %1173 = vmatprep.subr.mxu0 0.0
    %1174 = vmatpush1.msra.mxu0 0.0
    %1175 = vmatprep.subr.mxu0 0.0
    %1176 = vmatpush1.msra.mxu0 0.0
    %1177 = vmatprep.subr.mxu0 0.0
    %1178 = vmatpush1.msra.mxu0 0.0
    %1179 = vmatprep.subr.mxu0 0.0
    %1180 = vmatpush1.msra.mxu0 0.0
    %1181 = vmatprep.subr.mxu0 0.0
    %1182 = vmatpush1.msra.mxu0 0.0
    %1183 = vmatprep.subr.mxu0 0.0
    %1184 = vmatpush1.msra.mxu0 0.0
    %1185 = vmatprep.subr.mxu0 0.0
    %1186 = vmatpush1.msra.mxu0 0.0
    %1187 = vmatprep.subr.mxu0 0.0
    %1188 = vmatpush1.msra.mxu0 %v88
    %1189 = vmatprep.subr.mxu0 0.0
    %1190 = vmatpush2.msra.mxu0 0.0
    %1191 = vmatprep.subr.mxu0 0.0
    %1192 = vmatpush2.msra.mxu0 0.0
    %1193 = vmatprep.subr.mxu0 0.0
    %1194 = vmatpush2.msra.mxu0 0.0
    %1195 = vmatprep.subr.mxu0 0.0
    %1196 = vmatpush2.msra.mxu0 0.0
    %1197 = vmatprep.subr.mxu0 0.0
    %1198 = vmatpush2.msra.mxu0 0.0
    %1199 = vmatprep.subr.mxu0 0.0
    %1200 = vmatpush2.msra.mxu0 0.0
    %1201 = vmatprep.subr.mxu0 0.0
    %1202 = vmatpush2.msra.mxu0 0.0
    %1203 = vmatprep.subr.mxu0 0.0
    %1204 = vmatpush2.msra.mxu0 0.0
    %1205 = vmatprep.subr.mxu0 0.0
    %1206 = vmatpush2.msra.mxu0 0.0
    %1207 = vmatprep.subr.mxu0 0.0
    %1208 = vmatpush2.msra.mxu0 0.0
    %1209 = vmatprep.subr.mxu0 0.0
    %1210 = vmatpush2.msra.mxu0 0.0
    %1211 = vmatprep.subr.mxu0 0.0
    %1212 = vmatpush2.msra.mxu0 0.0
    %1213 = vmatprep.subr.mxu0 0.0
    %1214 = vmatpush2.msra.mxu0 0.0
    %1215 = vmatprep.subr.mxu0 0.0
    %1216 = vmatpush2.msra.mxu0 0.0
    %1217 = vmatprep.subr.mxu0 0.0
    %1218 = vmatpush2.msra.mxu0 0.0
    %1219 = vmatprep.subr.mxu0 0.0
    %1220 = vmatpush2.msra.mxu0 0.0
    %1221 = vmatprep.mubr.f32.mxu0 0.0
    %1222 = vmatmul.mubr.f32.gmra.mxu0 %v1155
    %v1223 = vpop.f32.mrf.mxu0
    %v1224 = vadd.f32 0.0, %v1223
    %v1225 = vpop.f32.mrf.mxu0
    %1226 = vdwg.mxu0
    %v1228 = vsel %vm700, %v786, 0
    %1230 = vmatprep.subr.mxu0 0.0
    %1231 = vmatpush1.msra.mxu0 0.0
    %1232 = vmatprep.subr.mxu0 0.0
    %1233 = vmatpush1.msra.mxu0 0.0
    %1234 = vmatprep.subr.mxu0 0.0
    %1235 = vmatpush1.msra.mxu0 0.0
    %1236 = vmatprep.subr.mxu0 0.0
    %1237 = vmatpush1.msra.mxu0 0.0
    %1238 = vmatprep.subr.mxu0 0.0
    %1239 = vmatpush1.msra.mxu0 0.0
    %1240 = vmatprep.subr.mxu0 0.0
    %1241 = vmatpush1.msra.mxu0 0.0
    %1242 = vmatprep.subr.mxu0 0.0
    %1243 = vmatpush1.msra.mxu0 0.0
    %1244 = vmatprep.subr.mxu0 0.0
    %1245 = vmatpush1.msra.mxu0 0.0
    %1246 = vmatprep.subr.mxu0 0.0
    %1247 = vmatpush1.msra.mxu0 0.0
    %1248 = vmatprep.subr.mxu0 0.0
    %1249 = vmatpush1.msra.mxu0 0.0
    %1250 = vmatprep.subr.mxu0 0.0
    %1251 = vmatpush1.msra.mxu0 0.0
    %1252 = vmatprep.subr.mxu0 0.0
    %1253 = vmatpush1.msra.mxu0 0.0
    %1254 = vmatprep.subr.mxu0 0.0
    %1255 = vmatpush1.msra.mxu0 0.0
    %1256 = vmatprep.subr.mxu0 0.0
    %1257 = vmatpush1.msra.mxu0 0.0
    %1258 = vmatprep.subr.mxu0 0.0
    %1259 = vmatpush1.msra.mxu0 0.0
    %1260 = vmatprep.subr.mxu0 0.0
    %1261 = vmatpush1.msra.mxu0 %v89
    %1262 = vmatprep.subr.mxu0 0.0
    %1263 = vmatpush2.msra.mxu0 0.0
    %1264 = vmatprep.subr.mxu0 0.0
    %1265 = vmatpush2.msra.mxu0 0.0
    %1266 = vmatprep.subr.mxu0 0.0
    %1267 = vmatpush2.msra.mxu0 0.0
    %1268 = vmatprep.subr.mxu0 0.0
    %1269 = vmatpush2.msra.mxu0 0.0
    %1270 = vmatprep.subr.mxu0 0.0
    %1271 = vmatpush2.msra.mxu0 0.0
    %1272 = vmatprep.subr.mxu0 0.0
    %1273 = vmatpush2.msra.mxu0 0.0
    %1274 = vmatprep.subr.mxu0 0.0
    %1275 = vmatpush2.msra.mxu0 0.0
    %1276 = vmatprep.subr.mxu0 0.0
    %1277 = vmatpush2.msra.mxu0 0.0
    %1278 = vmatprep.subr.mxu0 0.0
    %1279 = vmatpush2.msra.mxu0 0.0
    %1280 = vmatprep.subr.mxu0 0.0
    %1281 = vmatpush2.msra.mxu0 0.0
    %1282 = vmatprep.subr.mxu0 0.0
    %1283 = vmatpush2.msra.mxu0 0.0
    %1284 = vmatprep.subr.mxu0 0.0
    %1285 = vmatpush2.msra.mxu0 0.0
    %1286 = vmatprep.subr.mxu0 0.0
    %1287 = vmatpush2.msra.mxu0 0.0
    %1288 = vmatprep.subr.mxu0 0.0
    %1289 = vmatpush2.msra.mxu0 0.0
    %1290 = vmatprep.subr.mxu0 0.0
    %1291 = vmatpush2.msra.mxu0 0.0
    %1292 = vmatprep.subr.mxu0 0.0
    %1293 = vmatpush2.msra.mxu0 0.0
    %1294 = vmatprep.mubr.f32.mxu0 0.0
    %1295 = vmatmul.mubr.f32.gmra.mxu0 %v1228
    %v1296 = vpop.f32.mrf.mxu0
    %v1297 = vadd.f32 0.0, %v1296
    %v1298 = vpop.f32.mrf.mxu0
    %1299 = vdwg.mxu0
    %v1301 = vsel %vm700, %v788, 0
    %1303 = vmatprep.subr.mxu0 0.0
    %1304 = vmatpush1.msra.mxu0 0.0
    %1305 = vmatprep.subr.mxu0 0.0
    %1306 = vmatpush1.msra.mxu0 0.0
    %1307 = vmatprep.subr.mxu0 0.0
    %1308 = vmatpush1.msra.mxu0 0.0
    %1309 = vmatprep.subr.mxu0 0.0
    %1310 = vmatpush1.msra.mxu0 0.0
    %1311 = vmatprep.subr.mxu0 0.0
    %1312 = vmatpush1.msra.mxu0 0.0
    %1313 = vmatprep.subr.mxu0 0.0
    %1314 = vmatpush1.msra.mxu0 0.0
    %1315 = vmatprep.subr.mxu0 0.0
    %1316 = vmatpush1.msra.mxu0 0.0
    %1317 = vmatprep.subr.mxu0 0.0
    %1318 = vmatpush1.msra.mxu0 0.0
    %1319 = vmatprep.subr.mxu0 0.0
    %1320 = vmatpush1.msra.mxu0 0.0
    %1321 = vmatprep.subr.mxu0 0.0
    %1322 = vmatpush1.msra.mxu0 0.0
    %1323 = vmatprep.subr.mxu0 0.0
    %1324 = vmatpush1.msra.mxu0 0.0
    %1325 = vmatprep.subr.mxu0 0.0
    %1326 = vmatpush1.msra.mxu0 0.0
    %1327 = vmatprep.subr.mxu0 0.0
    %1328 = vmatpush1.msra.mxu0 0.0
    %1329 = vmatprep.subr.mxu0 0.0
    %1330 = vmatpush1.msra.mxu0 0.0
    %1331 = vmatprep.subr.mxu0 0.0
    %1332 = vmatpush1.msra.mxu0 0.0
    %1333 = vmatprep.subr.mxu0 0.0
    %1334 = vmatpush1.msra.mxu0 %v90
    %1335 = vmatprep.subr.mxu0 0.0
    %1336 = vmatpush2.msra.mxu0 0.0
    %1337 = vmatprep.subr.mxu0 0.0
    %1338 = vmatpush2.msra.mxu0 0.0
    %1339 = vmatprep.subr.mxu0 0.0
    %1340 = vmatpush2.msra.mxu0 0.0
    %1341 = vmatprep.subr.mxu0 0.0
    %1342 = vmatpush2.msra.mxu0 0.0
    %1343 = vmatprep.subr.mxu0 0.0
    %1344 = vmatpush2.msra.mxu0 0.0
    %1345 = vmatprep.subr.mxu0 0.0
    %1346 = vmatpush2.msra.mxu0 0.0
    %1347 = vmatprep.subr.mxu0 0.0
    %1348 = vmatpush2.msra.mxu0 0.0
    %1349 = vmatprep.subr.mxu0 0.0
    %1350 = vmatpush2.msra.mxu0 0.0
    %1351 = vmatprep.subr.mxu0 0.0
    %1352 = vmatpush2.msra.mxu0 0.0
    %1353 = vmatprep.subr.mxu0 0.0
    %1354 = vmatpush2.msra.mxu0 0.0
    %1355 = vmatprep.subr.mxu0 0.0
    %1356 = vmatpush2.msra.mxu0 0.0
    %1357 = vmatprep.subr.mxu0 0.0
    %1358 = vmatpush2.msra.mxu0 0.0
    %1359 = vmatprep.subr.mxu0 0.0
    %1360 = vmatpush2.msra.mxu0 0.0
    %1361 = vmatprep.subr.mxu0 0.0
    %1362 = vmatpush2.msra.mxu0 0.0
    %1363 = vmatprep.subr.mxu0 0.0
    %1364 = vmatpush2.msra.mxu0 0.0
    %1365 = vmatprep.subr.mxu0 0.0
    %1366 = vmatpush2.msra.mxu0 0.0
    %1367 = vmatprep.mubr.f32.mxu0 0.0
    %1368 = vmatmul.mubr.f32.gmra.mxu0 %v1301
    %v1369 = vpop.f32.mrf.mxu0
    %v1370 = vadd.f32 0.0, %v1369
    %v1371 = vpop.f32.mrf.mxu0
    %1372 = vdwg.mxu0
    %1373 = vst.msk [vmem:[#allocation9] sm:$0xff] %vm700, %v774
    %1374 = vst.msk [vmem:[#allocation9 + $0x8] sm:$0xff] %vm700, %v776
    %1375 = vst.msk [vmem:[#allocation9 + $0x10] sm:$0xff] %vm700, %v778
    %1376 = vst.msk [vmem:[#allocation9 + $0x18] sm:$0xff] %vm700, %v780
    %1377 = vst.msk [vmem:[#allocation9 + $0x20] sm:$0xff] %vm700, %v782
    %1378 = vst.msk [vmem:[#allocation9 + $0x28] sm:$0xff] %vm700, %v784
    %1379 = vst.msk [vmem:[#allocation9 + $0x30] sm:$0xff] %vm700, %v786
    %1380 = vst.msk [vmem:[#allocation9 + $0x38] sm:$0xff] %vm700, %v788
    %1381 = vst.msk [vmem:[#allocation8] sm:$0xff] %vm91, %v859
    %1382 = vst.msk [vmem:[#allocation8 + $0x8] sm:$0xff] %vm91, %v932
    %1383 = vst.msk [vmem:[#allocation8 + $0x10] sm:$0xff] %vm91, %v1005
    %1384 = vst.msk [vmem:[#allocation8 + $0x18] sm:$0xff] %vm91, %v1078
    %1385 = vst.msk [vmem:[#allocation8 + $0x20] sm:$0xff] %vm91, %v1151
    %1386 = vst.msk [vmem:[#allocation8 + $0x28] sm:$0xff] %vm91, %v1224
    %1387 = vst.msk [vmem:[#allocation8 + $0x30] sm:$0xff] %vm91, %v1297
    %1388 = vst.msk [vmem:[#allocation8 + $0x38] sm:$0xff] %vm91, %v1370
    // Predicated region
    $region26: #{tpu_custom_call.1} parent=1 // pred_check
      _
    $region27: #{tpu_custom_call.1} parent=1 // pred_check_branch
      %1390 = sbr.rel (0) target = $region29
    $region28: #{tpu_custom_call.1} parent=1 // pred_region
      %s1392 = ssub.s32 1024, 1024
      %1393 = vsyncadd [#allocation4], %s1392
      %s1394 = sshll.u32 [#allocation8], 4
      %s1395 = int_to_ptr.vmem [resolvable:$true] %s1394
      %1400 = dma.vmem_to_hbm [thread:$0]  %s1395, 1024, %s3, [#allocation4], 128, 128, 8
    $region29: #{tpu_custom_call.1} parent=1 // pred_fallthru
      _
    // Predicated region
    $region30: #{tpu_custom_call.1} parent=1 // pred_check
      _
    $region31: #{tpu_custom_call.1} parent=1 // pred_check_branch
      %1402 = sbr.rel (0) target = $region33
    $region32: #{tpu_custom_call.1} parent=1 // pred_region
      %s1404 = ssub.s32 1024, 1024
      %1405 = vsyncadd [#allocation10], %s1404
      %s1406 = sshll.u32 [#allocation9], 4
      %s1407 = int_to_ptr.vmem [resolvable:$true] %s1406
      %1412 = dma.vmem_to_hbm [thread:$0]  %s1407, 1024, %s4, [#allocation10], 128, 128, 8
    $region33: #{tpu_custom_call.1} parent=1 // pred_fallthru
      _
    // Predicated region
    $region34: #{tpu_custom_call.1} parent=1 // pred_check
      _
    $region35: #{tpu_custom_call.1} parent=1 // pred_check_branch
      %1414 = sbr.rel (0) target = $region37
    $region36: #{tpu_custom_call.1} parent=1 // pred_region
      %1415 = dma.done [#allocation4], 1024
    $region37: #{tpu_custom_call.1} parent=1 // pred_fallthru
      _
    // Predicated region
    $region38: #{tpu_custom_call.1} parent=1 // pred_check
      _
    $region39: #{tpu_custom_call.1} parent=1 // pred_check_branch
      %1417 = sbr.rel (0) target = $region41
    $region40: #{tpu_custom_call.1} parent=1 // pred_region
      %1418 = dma.done [#allocation10], 1024
    $region41: #{tpu_custom_call.1} parent=1 // pred_fallthru
      _
    %1419 = vsyncpa [#allocation3], 1
    %1420 = vsyncpa [#allocation6], 1
    %1421 = vsyncpa [#allocation4], 1
    %1422 = vsyncpa [#allocation10], 1

</llo_original>
